<compile_context>
chip_gen: v5e
topology: v5e:2x2
jax: 0.10.0
libtpu: 0.0.40
codegen_flags: <defaults>
</compile_context>

<pallas_src>
import math
from functools import partial

import jax
import jax.numpy as jnp
import numpy as np
from jax import lax
from jax.experimental import pallas as pl
from jax.experimental.pallas import tpu as pltpu

NUM_HEADS = 8
EPS = 1e-8


def _pick_tile(dim, target, align):
    """Largest `align`-multiple <= target that divides dim, else the full dim."""
    if dim <= target:
        return dim
    t = (target // align) * align
    while t >= align:
        if dim % t == 0:
            return t
        t -= align
    return dim  # TODO(synk): ragged-edge grid for pathological sizes


# --------------------------------------------------------------------------
# 1. Tiled GEMM (Q and K|V projections), f32 accumulator, cdt output
# --------------------------------------------------------------------------

def _matmul_kernel(a_ref, b_ref, o_ref, acc_ref, *, cdt):
    @pl.when(pl.program_id(2) == 0)
    def _():
        acc_ref[...] = jnp.zeros_like(acc_ref)

    acc_ref[...] += jnp.dot(a_ref[...].astype(cdt), b_ref[...].astype(cdt),
                            preferred_element_type=jnp.float32)

    @pl.when(pl.program_id(2) == pl.num_programs(2) - 1)
    def _():
        o_ref[...] = acc_ref[...].astype(o_ref.dtype)


def pallas_matmul(a, b, *, tm=512, tn=256, tk=512, compute_dtype=jnp.float32):
    M, K = a.shape
    K2, N = b.shape
    assert K == K2
    tm = _pick_tile(M, tm, 8)
    tn = _pick_tile(N, tn, 128)
    tk = _pick_tile(K, tk, 128)
    grid = (M // tm, N // tn, K // tk)
    return pl.pallas_call(
        partial(_matmul_kernel, cdt=compute_dtype),
        out_shape=jax.ShapeDtypeStruct((M, N), compute_dtype),
        grid_spec=pltpu.PrefetchScalarGridSpec(
            num_scalar_prefetch=0,
            grid=grid,
            in_specs=[pl.BlockSpec((tm, tk), lambda i, j, k: (i, k)),
                      pl.BlockSpec((tk, tn), lambda i, j, k: (k, j))],
            out_specs=pl.BlockSpec((tm, tn), lambda i, j, k: (i, j)),
            scratch_shapes=[pltpu.VMEM((tm, tn), jnp.float32)]),
        compiler_params=pltpu.CompilerParams(
            dimension_semantics=("parallel", "parallel", "arbitrary")),
    )(a, b)


# --------------------------------------------------------------------------
# 2. Query-tiled fused attention + WO + residual + layernorm
# --------------------------------------------------------------------------

def _attn_kernel(q_ref, kv_ref, x_ref, wo_ref, ga_ref, ba_ref, g1_ref, bt1_ref,
                 o_ref, ctx_ref, *, nh, dh, cdt):
    S_kv = kv_ref.shape[1]
    H = nh * dh
    q_all = q_ref[0]           # (tq, H)  cdt, 1/sqrt(d_k) already folded in
    kv = kv_ref[0]             # (S, 2H)  cdt, full keys/values for this batch
    x_res = x_ref[0]           # (tq, D)  f32 residual
    wo = wo_ref[...]           # (H, D)   cdt, resident across the grid

    # TODO(synk): flash-style key tiling (online softmax over key blocks) for
    # very long S, where the (1, S, 2H) kv block / (tq, S) scores overflow the
    # 64 MiB v7x VMEM.
    for h in range(nh):                                   # static head unroll
        base = h * dh
        qh = q_all[:, base:base + dh]
        kh = kv[:, base:base + dh]
        vh = kv[:, H + base:H + base + dh]

        s = lax.dot_general(qh, kh, (((1,), (1,)), ((), ())),
                            preferred_element_type=jnp.float32)     # (tq, S)

        # norm_forward_in_attention (unbiased var over keys) + per-head affine
        # fused into one per-row FMA; single-pass stats in f32.
        row_sum = jnp.sum(s, axis=-1, keepdims=True)
        row_sq = jnp.sum(s * s, axis=-1, keepdims=True)
        mu = row_sum * (1.0 / S_kv)
        var = jnp.maximum((row_sq - mu * row_sum) * (1.0 / (S_kv - 1)), 0.0)
        a_row = ga_ref[h, 0] * lax.rsqrt(var + EPS)
        c_row = ba_ref[h, 0] - a_row * mu
        e = s * a_row + c_row

        # softmax over keys: f32 row stats, (tq,S) elementwise chain in cdt
        # (bf16 on v6e/v7x; pass compute_dtype=float32 on v5e).
        m = jnp.max(e, axis=-1, keepdims=True)
        p = jnp.exp((e - m).astype(cdt))
        denom = jnp.sum(p.astype(jnp.float32), axis=-1, keepdims=True)
        alpha = p * pl.reciprocal(denom, approx=True).astype(cdt)

        # head-major context: columns [h*dh:(h+1)*dh] of the (tq, H) scratch
        ctx_ref[:, base:base + dh] = jnp.dot(alpha, vh,
                                             preferred_element_type=jnp.float32)

    # torch.cat(head0..7, dim=2) @ WO as ONE K=H matmul (not 8 short-K passes).
    x1 = jnp.dot(ctx_ref[...].astype(cdt), wo, preferred_element_type=jnp.float32)

    # add_Norm(x1, x): residual + unbiased layernorm over the feature dim.
    z = x1 + x_res
    D = z.shape[-1]
    mu = jnp.mean(z, axis=-1, keepdims=True)
    var = jnp.sum((z - mu) ** 2, axis=-1, keepdims=True) * (1.0 / (D - 1))
    zn = (z - mu) * lax.rsqrt(var + EPS)
    o_ref[0] = g1_ref[0] * zn + bt1_ref[0]
    # TODO(synk): zero-pad D (300 -> 384) for lane-dense stores; needs masked
    # layernorm statistics, so it is left to a future revision.


def pallas_attention_block(q, kv, x, wo, gamma_a, beta_a, gamma1, beta1, *,
                           num_heads, q_tile=256, compute_dtype=jnp.float32):
    B, S, H = q.shape
    D = x.shape[-1]
    dh = H // num_heads
    tq = _pick_tile(S, q_tile, 8)
    smem = lambda: pl.BlockSpec(memory_space=pltpu.MemorySpace.SMEM)
    return pl.pallas_call(
        partial(_attn_kernel, nh=num_heads, dh=dh, cdt=compute_dtype),
        out_shape=jax.ShapeDtypeStruct((B, S, D), jnp.float32),
        grid=(B, S // tq),
        in_specs=[pl.BlockSpec((1, tq, H), lambda b, qi: (b, qi, 0)),
                  pl.BlockSpec((1, S, 2 * H), lambda b, qi: (b, 0, 0)),
                  pl.BlockSpec((1, tq, D), lambda b, qi: (b, qi, 0)),
                  pl.BlockSpec((H, D), lambda b, qi: (0, 0)),   # WO resident
                  smem(), smem(), smem(), smem()],
        out_specs=pl.BlockSpec((1, tq, D), lambda b, qi: (b, qi, 0)),
        scratch_shapes=[pltpu.VMEM((tq, H), jnp.float32)],
        compiler_params=pltpu.CompilerParams(
            dimension_semantics=("parallel", "parallel")),
    )(q, kv, x, wo, gamma_a, beta_a, gamma1, beta1)


# --------------------------------------------------------------------------
# 3. Fused FFN + residual + layernorm, row-tiled (weights resident in VMEM)
# --------------------------------------------------------------------------

def _ffn_kernel(x_ref, w1_ref, b1_ref, w2_ref, b2_ref, g2_ref, bt2_ref,
                o_ref, *, cdt):
    x = x_ref[...]                                             # (tm, D) f32
    h = jnp.dot(x.astype(cdt), w1_ref[...],
                preferred_element_type=jnp.float32) + b1_ref[...]
    h = jnp.maximum(h, 0.0).astype(cdt)                        # (tm, 4D) in cdt
    x3 = jnp.dot(h, w2_ref[...],
                 preferred_element_type=jnp.float32) + b2_ref[...]
    z = x3 + x                                                 # residual
    D = z.shape[-1]
    mu = jnp.mean(z, axis=-1, keepdims=True)
    var = jnp.sum((z - mu) ** 2, axis=-1, keepdims=True) * (1.0 / (D - 1))
    zn = (z - mu) * lax.rsqrt(var + EPS)
    o_ref[...] = g2_ref[0] * zn + bt2_ref[0]


def pallas_ffn_block(x2d, w1, b1, w2, b2, gamma2, beta2, *,
                     row_tile=128, compute_dtype=jnp.float32):
    N, D = x2d.shape
    D4 = w1.shape[1]
    tm = _pick_tile(N, row_tile, 8)
    smem = lambda: pl.BlockSpec(memory_space=pltpu.MemorySpace.SMEM)
    # TODO(synk): for very large D on v7x, add pipeline_mode=pl.Buffered(1) to
    # the resident W1/W2 specs (or a k-tiled grid over the 4D hidden dim) to
    # avoid double-buffering constant weights.
    return pl.pallas_call(
        partial(_ffn_kernel, cdt=compute_dtype),
        out_shape=jax.ShapeDtypeStruct((N, D), jnp.float32),
        grid=(N // tm,),
        in_specs=[pl.BlockSpec((tm, D), lambda i: (i, 0)),
                  pl.BlockSpec((D, D4), lambda i: (0, 0)),    # W1 resident
                  pl.BlockSpec((1, D4), lambda i: (0, 0)),
                  pl.BlockSpec((D4, D), lambda i: (0, 0)),    # W2 resident
                  pl.BlockSpec((1, D), lambda i: (0, 0)),
                  smem(), smem()],
        out_specs=pl.BlockSpec((tm, D), lambda i: (i, 0)),
        compiler_params=pltpu.CompilerParams(
            dimension_semantics=("parallel",)),
    )(x2d, w1, b1, w2, b2, gamma2, beta2)


# --------------------------------------------------------------------------
# Parameter preparation (once) + jitted forward
# --------------------------------------------------------------------------

def prepare_params(raw):
    """Pre-transpose & head-permute weights; fold 1/sqrt(d_k) into WQ."""
    nh = NUM_HEADS
    H, D = raw["WQ"].shape
    dh = H // nh

    def head_contig(w):
        # x @ w.T with columns permuted so head h occupies cols [h*dh:(h+1)*dh]
        # (PyTorch: head h, feature d comes from projection column d*nh + h).
        return w.T.reshape(D, dh, nh).transpose(0, 2, 1).reshape(D, H)

    inv_sqrt_dk = 1.0 / math.sqrt(D)                 # d_k = x.shape[-1] = D
    return {
        "w_q": head_contig(raw["WQ"]) * inv_sqrt_dk,
        "w_kv": jnp.concatenate([head_contig(raw["WK"]),
                                 head_contig(raw["WV"])], axis=1),   # (D, 2H)
        "WO": raw["WO"],                      # used un-transposed, as in torch
        "W1": raw["W1"], "b1": raw["b1"].reshape(1, -1),
        "W2": raw["W2"], "b2": raw["b2"].reshape(1, -1),
        "gamma_a1": raw["gamma_a1"], "beta_a1": raw["beta_a1"],      # (8, 1)
        "gamma1": raw["gamma1"].reshape(1), "beta1": raw["beta1"].reshape(1),
        "gamma2": raw["gamma2"].reshape(1), "beta2": raw["beta2"].reshape(1),
    }


@partial(jax.jit, static_argnames=("compute_dtype",))
def encoder_forward(x, params, *, compute_dtype=jnp.float32):
    B, S, D = x.shape
    H = params["WO"].shape[0]
    assert H % NUM_HEADS == 0 and S > 1 and D > 1     # unbiased var needs n > 1
    cdt = compute_dtype
    x2d = x.reshape(B * S, D)

    # One-time weight casts outside the hot kernels (bf16 halves resident VMEM
    # and DMA traffic on v6e/v7x; no-ops for the f32 path).
    w_q, w_kv = params["w_q"].astype(cdt), params["w_kv"].astype(cdt)
    wo, w1, w2 = (params["WO"].astype(cdt), params["W1"].astype(cdt),
                  params["W2"].astype(cdt))

    # Projections: outputs emitted directly in compute_dtype.
    q = pallas_matmul(x2d, w_q, compute_dtype=cdt).reshape(B, S, H)
    kv = pallas_matmul(x2d, w_kv, compute_dtype=cdt).reshape(B, S, 2 * H)

    # Attention + WO + residual + layernorm, query-tiled grid (B, S//tq).
    x2 = pallas_attention_block(q, kv, x, wo,
                                params["gamma_a1"], params["beta_a1"],
                                params["gamma1"], params["beta1"],
                                num_heads=NUM_HEADS, compute_dtype=cdt)

    # FFN + residual + layernorm, one row-tiled kernel.
    x4 = pallas_ffn_block(x2.reshape(B * S, D),
                          w1, params["b1"], w2, params["b2"],
                          params["gamma2"], params["beta2"],
                          compute_dtype=cdt)
    return x4.reshape(B, S, D)


# --------------------------- Pure-JAX reference ----------------------------

def encoder_forward_ref(x, p):
    B, S, D = x.shape
    nh = NUM_HEADS
    H = p["WQ"].shape[0]
    dh = H // nh

    def proj(w):
        return (x @ w.T).reshape(B, S, dh, nh).transpose(3, 0, 1, 2)

    q, k, v = proj(p["WQ"]), proj(p["WK"]), proj(p["WV"])
    e_pre = jnp.einsum("hbqd,hbkd->hbqk", q, k,
                       precision=lax.Precision.HIGHEST) / math.sqrt(D)
    mu = jnp.mean(e_pre, axis=3, keepdims=True)
    var = jnp.var(e_pre, axis=3, ddof=1, keepdims=True)
    xn = (e_pre - mu) / jnp.sqrt(var + EPS)
    e = p["gamma_a1"].reshape(nh, 1, 1, 1) * xn + p["beta_a1"].reshape(nh, 1, 1, 1)
    alpha = jax.nn.softmax(e, axis=3)
    heads = jnp.einsum("hbqk,hbkd->hbqd", alpha, v, precision=lax.Precision.HIGHEST)
    a = heads.transpose(1, 2, 0, 3).reshape(B, S, nh * dh)
    x1 = jnp.matmul(a, p["WO"], precision=lax.Precision.HIGHEST)

    def add_norm(xx, yy, g, b):
        z = xx + yy
        mu = jnp.mean(z, axis=2, keepdims=True)
        var = jnp.var(z, axis=2, ddof=1, keepdims=True)
        return g[0] * ((z - mu) / jnp.sqrt(var + EPS)) + b[0]

    x2 = add_norm(x1, x, p["gamma1"], p["beta1"])
    lin1 = jnp.maximum(jnp.matmul(x2, p["W1"], precision=lax.Precision.HIGHEST) + p["b1"], 0.0)
    x3 = jnp.matmul(lin1, p["W2"], precision=lax.Precision.HIGHEST) + p["b2"]
    x4 = add_norm(x3, x2, p["gamma2"], p["beta2"])
    return x4


# --------------------------------- main ------------------------------------

def init_params(key, hidden_dim, hidden_dim_):
    ks = jax.random.split(key, 8)
    return {
        "WQ": jax.random.normal(ks[0], (hidden_dim_, hidden_dim), jnp.float32),
        "WK": jax.random.normal(ks[1], (hidden_dim_, hidden_dim), jnp.float32),
        "WV": jax.random.normal(ks[2], (hidden_dim_, hidden_dim), jnp.float32),
        "WO": jax.random.normal(ks[3], (hidden_dim_, hidden_dim), jnp.float32),
        "W1": jax.random.normal(ks[4], (hidden_dim, 4 * hidden_dim), jnp.float32),
        "b1": jax.random.normal(ks[5], (4 * hidden_dim,), jnp.float32),
        "W2": jax.random.normal(ks[6], (4 * hidden_dim, hidden_dim), jnp.float32),
        "b2": jax.random.normal(ks[7], (hidden_dim,), jnp.float32),
        "gamma_a1": jnp.ones((NUM_HEADS, 1), jnp.float32),
        "beta_a1": jnp.zeros((NUM_HEADS, 1), jnp.float32),
        "gamma1": jnp.ones((1,), jnp.float32),
        "beta1": jnp.zeros((1,), jnp.float32),
        "gamma2": jnp.ones((1,), jnp.float32),
        "beta2": jnp.zeros((1,), jnp.float32),
    }


if __name__ == "__main__":
    # Small stand-ins for hidden_dim=300 / hidden_dim_=512.
    hidden_dim, hidden_dim_ = 32, 64
    B, S = 2, 8
    key = jax.random.PRNGKey(0)
    kx, kp = jax.random.split(key)
    x = jax.random.normal(kx, (B, S, hidden_dim), jnp.float32)
    raw = init_params(kp, hidden_dim, hidden_dim_)
    params = prepare_params(raw)

    # f32 MXU-input path (reference-accurate; use on v5e).
    out = jax.block_until_ready(encoder_forward(x, params,
                                                compute_dtype=jnp.float32))
    ref = encoder_forward_ref(x, raw)
    np.testing.assert_allclose(np.asarray(out), np.asarray(ref),
                               rtol=5e-2, atol=5e-2)
    assert bool(jnp.all(jnp.isfinite(out)))

    # bf16 MXU/softmax-chain path (recommended on v6e/v7x): compile + sanity.
    out_bf16 = jax.block_until_ready(
        encoder_forward(x, params, compute_dtype=jnp.bfloat16))
    assert bool(jnp.all(jnp.isfinite(out_bf16)))
    assert float(jnp.max(jnp.abs(out_bf16 - ref))) < 0.5

    print("KERNEL_OK")
</pallas_src>

<mosaic_0001>
module attributes {stable_mosaic.version = 11 : i64} {
  func.func @_matmul_kernel(%arg0: i32, %arg1: i32, %arg2: i32, %arg3: memref<16x32xf32, #tpu.memory_space<vmem>>, %arg4: memref<32x64xf32, #tpu.memory_space<vmem>>, %arg5: memref<16x64xf32, #tpu.memory_space<vmem>>, %arg6: memref<16x64xf32, #tpu.memory_space<vmem>>) attributes {dimension_semantics = [#tpu.dimension_semantics<parallel>, #tpu.dimension_semantics<parallel>, #tpu.dimension_semantics<arbitrary>], iteration_bounds = array<i64: 1, 1, 1>, scalar_prefetch = 0 : i64, scratch_operands = 1 : i64, tpu.core_type = #tpu.core_type<tc>, window_params = [{transform_indices = @transform_0, window_bounds = array<i64: 16, 32>}, {transform_indices = @transform_1, window_bounds = array<i64: 32, 64>}, {transform_indices = @transform_2, window_bounds = array<i64: 16, 64>}]} {
    %c0_i32 = arith.constant 0 : i32
    %0 = arith.cmpi eq, %arg2, %c0_i32 : i32
    %1 = arith.extui %0 : i1 to i32
    %c0_i32_0 = arith.constant 0 : i32
    %2 = arith.cmpi ne, %1, %c0_i32_0 : i32
    scf.if %2 {
      %cst_10 = arith.constant 0.000000e+00 : f32
      %12 = vector.broadcast %cst_10 : f32 to vector<16x64xf32>
      %c0_11 = arith.constant 0 : index
      %c0_12 = arith.constant 0 : index
      %13 = vector.load %arg6[%c0_11, %c0_12] : memref<16x64xf32, #tpu.memory_space<vmem>>, vector<16x64xf32>
      tpu.vector_store %arg6[%c0_11, %c0_12], %12 {strides = array<i32>} : memref<16x64xf32, #tpu.memory_space<vmem>>, vector<16x64xf32>,
    } else {
    }
    %c0 = arith.constant 0 : index
    %c0_1 = arith.constant 0 : index
    %3 = vector.load %arg6[%c0, %c0_1] : memref<16x64xf32, #tpu.memory_space<vmem>>, vector<16x64xf32>
    %c0_2 = arith.constant 0 : index
    %c0_3 = arith.constant 0 : index
    %4 = vector.load %arg3[%c0_2, %c0_3] : memref<16x32xf32, #tpu.memory_space<vmem>>, vector<16x32xf32>
    %c0_4 = arith.constant 0 : index
    %c0_5 = arith.constant 0 : index
    %5 = vector.load %arg4[%c0_4, %c0_5] : memref<32x64xf32, #tpu.memory_space<vmem>>, vector<32x64xf32>
    %cst = arith.constant dense<0.000000e+00> : vector<16x64xf32>
    %6 = tpu.matmul %4, %5, %cst {dimension_numbers = #tpu.dot_dimension_numbers<[1], [0], [0], [1], [0, 0, 1, 1], [], []>} : vector<16x32xf32>, vector<32x64xf32>, vector<16x64xf32> -> vector<16x64xf32>
    %7 = arith.addf %3, %6 : vector<16x64xf32>
    %c0_6 = arith.constant 0 : index
    %c0_7 = arith.constant 0 : index
    %8 = vector.load %arg6[%c0_6, %c0_7] : memref<16x64xf32, #tpu.memory_space<vmem>>, vector<16x64xf32>
    tpu.vector_store %arg6[%c0_6, %c0_7], %7 {strides = array<i32>} : memref<16x64xf32, #tpu.memory_space<vmem>>, vector<16x64xf32>,
    %c0_i32_8 = arith.constant 0 : i32
    %9 = arith.cmpi eq, %arg2, %c0_i32_8 : i32
    %10 = arith.extui %9 : i1 to i32
    %c0_i32_9 = arith.constant 0 : i32
    %11 = arith.cmpi ne, %10, %c0_i32_9 : i32
    scf.if %11 {
      %c0_10 = arith.constant 0 : index
      %c0_11 = arith.constant 0 : index
      %12 = vector.load %arg6[%c0_10, %c0_11] : memref<16x64xf32, #tpu.memory_space<vmem>>, vector<16x64xf32>
      %c0_12 = arith.constant 0 : index
      %c0_13 = arith.constant 0 : index
      %13 = vector.load %arg5[%c0_12, %c0_13] : memref<16x64xf32, #tpu.memory_space<vmem>>, vector<16x64xf32>
      tpu.vector_store %arg5[%c0_12, %c0_13], %12 {strides = array<i32>} : memref<16x64xf32, #tpu.memory_space<vmem>>, vector<16x64xf32>,
    } else {
    }
    return
  }
  func.func @transform_0(%arg0: i32, %arg1: i32, %arg2: i32) -> (i32, i32) {
    %c0_i32 = arith.constant 0 : i32
    return %arg0, %arg2 : i32, i32
  }
  func.func @transform_1(%arg0: i32, %arg1: i32, %arg2: i32) -> (i32, i32) {
    %c0_i32 = arith.constant 0 : i32
    return %arg2, %arg1 : i32, i32
  }
  func.func @transform_2(%arg0: i32, %arg1: i32, %arg2: i32) -> (i32, i32) {
    %c0_i32 = arith.constant 0 : i32
    return %arg0, %arg1 : i32, i32
  }
}

module attributes {stable_mosaic.version = 11 : i64} {
  func.func @_matmul_kernel(%arg0: i32, %arg1: i32, %arg2: i32, %arg3: memref<16x32xf32, #tpu.memory_space<vmem>>, %arg4: memref<32x128xf32, #tpu.memory_space<vmem>>, %arg5: memref<16x128xf32, #tpu.memory_space<vmem>>, %arg6: memref<16x128xf32, #tpu.memory_space<vmem>>) attributes {dimension_semantics = [#tpu.dimension_semantics<parallel>, #tpu.dimension_semantics<parallel>, #tpu.dimension_semantics<arbitrary>], iteration_bounds = array<i64: 1, 1, 1>, scalar_prefetch = 0 : i64, scratch_operands = 1 : i64, tpu.core_type = #tpu.core_type<tc>, window_params = [{transform_indices = @transform_0, window_bounds = array<i64: 16, 32>}, {transform_indices = @transform_1, window_bounds = array<i64: 32, 128>}, {transform_indices = @transform_2, window_bounds = array<i64: 16, 128>}]} {
    %c0_i32 = arith.constant 0 : i32
    %0 = arith.cmpi eq, %arg2, %c0_i32 : i32
    %1 = arith.extui %0 : i1 to i32
    %c0_i32_0 = arith.constant 0 : i32
    %2 = arith.cmpi ne, %1, %c0_i32_0 : i32
    scf.if %2 {
      %cst_10 = arith.constant 0.000000e+00 : f32
      %12 = vector.broadcast %cst_10 : f32 to vector<16x128xf32>
      %c0_11 = arith.constant 0 : index
      %c0_12 = arith.constant 0 : index
      %13 = vector.load %arg6[%c0_11, %c0_12] : memref<16x128xf32, #tpu.memory_space<vmem>>, vector<16x128xf32>
      tpu.vector_store %arg6[%c0_11, %c0_12], %12 {strides = array<i32>} : memref<16x128xf32, #tpu.memory_space<vmem>>, vector<16x128xf32>,
    } else {
    }
    %c0 = arith.constant 0 : index
    %c0_1 = arith.constant 0 : index
    %3 = vector.load %arg6[%c0, %c0_1] : memref<16x128xf32, #tpu.memory_space<vmem>>, vector<16x128xf32>
    %c0_2 = arith.constant 0 : index
    %c0_3 = arith.constant 0 : index
    %4 = vector.load %arg3[%c0_2, %c0_3] : memref<16x32xf32, #tpu.memory_space<vmem>>, vector<16x32xf32>
    %c0_4 = arith.constant 0 : index
    %c0_5 = arith.constant 0 : index
    %5 = vector.load %arg4[%c0_4, %c0_5] : memref<32x128xf32, #tpu.memory_space<vmem>>, vector<32x128xf32>
    %cst = arith.constant dense<0.000000e+00> : vector<16x128xf32>
    %6 = tpu.matmul %4, %5, %cst {dimension_numbers = #tpu.dot_dimension_numbers<[1], [0], [0], [1], [0, 0, 1, 1], [], []>} : vector<16x32xf32>, vector<32x128xf32>, vector<16x128xf32> -> vector<16x128xf32>
    %7 = arith.addf %3, %6 : vector<16x128xf32>
    %c0_6 = arith.constant 0 : index
    %c0_7 = arith.constant 0 : index
    %8 = vector.load %arg6[%c0_6, %c0_7] : memref<16x128xf32, #tpu.memory_space<vmem>>, vector<16x128xf32>
    tpu.vector_store %arg6[%c0_6, %c0_7], %7 {strides = array<i32>} : memref<16x128xf32, #tpu.memory_space<vmem>>, vector<16x128xf32>,
    %c0_i32_8 = arith.constant 0 : i32
    %9 = arith.cmpi eq, %arg2, %c0_i32_8 : i32
    %10 = arith.extui %9 : i1 to i32
    %c0_i32_9 = arith.constant 0 : i32
    %11 = arith.cmpi ne, %10, %c0_i32_9 : i32
    scf.if %11 {
      %c0_10 = arith.constant 0 : index
      %c0_11 = arith.constant 0 : index
      %12 = vector.load %arg6[%c0_10, %c0_11] : memref<16x128xf32, #tpu.memory_space<vmem>>, vector<16x128xf32>
      %c0_12 = arith.constant 0 : index
      %c0_13 = arith.constant 0 : index
      %13 = vector.load %arg5[%c0_12, %c0_13] : memref<16x128xf32, #tpu.memory_space<vmem>>, vector<16x128xf32>
      tpu.vector_store %arg5[%c0_12, %c0_13], %12 {strides = array<i32>} : memref<16x128xf32, #tpu.memory_space<vmem>>, vector<16x128xf32>,
    } else {
    }
    return
  }
  func.func @transform_0(%arg0: i32, %arg1: i32, %arg2: i32) -> (i32, i32) {
    %c0_i32 = arith.constant 0 : i32
    return %arg0, %arg2 : i32, i32
  }
  func.func @transform_1(%arg0: i32, %arg1: i32, %arg2: i32) -> (i32, i32) {
    %c0_i32 = arith.constant 0 : i32
    return %arg2, %arg1 : i32, i32
  }
  func.func @transform_2(%arg0: i32, %arg1: i32, %arg2: i32) -> (i32, i32) {
    %c0_i32 = arith.constant 0 : i32
    return %arg0, %arg1 : i32, i32
  }
}

module attributes {stable_mosaic.version = 11 : i64} {
  func.func @_ffn_kernel(%arg0: i32, %arg1: memref<16x32xf32, #tpu.memory_space<vmem>>, %arg2: memref<32x128xf32, #tpu.memory_space<vmem>>, %arg3: memref<1x128xf32, #tpu.memory_space<vmem>>, %arg4: memref<128x32xf32, #tpu.memory_space<vmem>>, %arg5: memref<1x32xf32, #tpu.memory_space<vmem>>, %arg6: memref<1xf32, #tpu.memory_space<smem>>, %arg7: memref<1xf32, #tpu.memory_space<smem>>, %arg8: memref<16x32xf32, #tpu.memory_space<vmem>>) attributes {dimension_semantics = [#tpu.dimension_semantics<parallel>], iteration_bounds = array<i64: 1>, scalar_prefetch = 0 : i64, scratch_operands = 0 : i64, tpu.core_type = #tpu.core_type<tc>, window_params = [{transform_indices = @transform_0, window_bounds = array<i64: 16, 32>}, {pipeline_mode = #tpu.pipeline_mode<synchronous>, transform_indices = @transform_1, window_bounds = array<i64: 32, 128>}, {pipeline_mode = #tpu.pipeline_mode<synchronous>, transform_indices = @transform_2, window_bounds = array<i64: 1, 128>}, {pipeline_mode = #tpu.pipeline_mode<synchronous>, transform_indices = @transform_3, window_bounds = array<i64: 128, 32>}, {pipeline_mode = #tpu.pipeline_mode<synchronous>, transform_indices = @transform_4, window_bounds = array<i64: 1, 32>}, {transform_indices = @transform_5, window_bounds = array<i64: 1>}, {transform_indices = @transform_6, window_bounds = array<i64: 1>}, {transform_indices = @transform_7, window_bounds = array<i64: 16, 32>}]} {
    %c0 = arith.constant 0 : index
    %c0_0 = arith.constant 0 : index
    %0 = vector.load %arg1[%c0, %c0_0] : memref<16x32xf32, #tpu.memory_space<vmem>>, vector<16x32xf32>
    %c0_1 = arith.constant 0 : index
    %c0_2 = arith.constant 0 : index
    %1 = vector.load %arg2[%c0_1, %c0_2] : memref<32x128xf32, #tpu.memory_space<vmem>>, vector<32x128xf32>
    %cst = arith.constant dense<0.000000e+00> : vector<16x128xf32>
    %2 = tpu.matmul %0, %1, %cst {dimension_numbers = #tpu.dot_dimension_numbers<[1], [0], [0], [1], [0, 0, 1, 1], [], []>} : vector<16x32xf32>, vector<32x128xf32>, vector<16x128xf32> -> vector<16x128xf32>
    %c0_3 = arith.constant 0 : index
    %c0_4 = arith.constant 0 : index
    %3 = vector.load %arg3[%c0_3, %c0_4] : memref<1x128xf32, #tpu.memory_space<vmem>>, vector<1x128xf32>
    %4 = vector.broadcast %3 : vector<1x128xf32> to vector<16x128xf32>
    %5 = arith.addf %2, %4 : vector<16x128xf32>
    %cst_5 = arith.constant 0.000000e+00 : f32
    %6 = vector.broadcast %cst_5 : f32 to vector<16x128xf32>
    %7 = arith.maximumf %5, %6 : vector<16x128xf32>
    %c0_6 = arith.constant 0 : index
    %c0_7 = arith.constant 0 : index
    %8 = vector.load %arg4[%c0_6, %c0_7] : memref<128x32xf32, #tpu.memory_space<vmem>>, vector<128x32xf32>
    %cst_8 = arith.constant dense<0.000000e+00> : vector<16x32xf32>
    %9 = tpu.matmul %7, %8, %cst_8 {dimension_numbers = #tpu.dot_dimension_numbers<[1], [0], [0], [1], [0, 0, 1, 1], [], []>} : vector<16x128xf32>, vector<128x32xf32>, vector<16x32xf32> -> vector<16x32xf32>
    %c0_9 = arith.constant 0 : index
    %c0_10 = arith.constant 0 : index
    %10 = vector.load %arg5[%c0_9, %c0_10] : memref<1x32xf32, #tpu.memory_space<vmem>>, vector<1x32xf32>
    %11 = vector.broadcast %10 : vector<1x32xf32> to vector<16x32xf32>
    %12 = arith.addf %9, %11 : vector<16x32xf32>
    %13 = arith.addf %12, %0 : vector<16x32xf32>
    %cst_11 = arith.constant dense<0.000000e+00> : vector<16xf32>
    %14 = vector.multi_reduction <add>, %13, %cst_11 [1] : vector<16x32xf32> to vector<16xf32>
    %15 = vector.shape_cast %14 : vector<16xf32> to vector<16x1xf32>
    %cst_12 = arith.constant 3.200000e+01 : f32
    %16 = vector.broadcast %cst_12 : f32 to vector<16x1xf32>
    %17 = arith.divf %15, %16 : vector<16x1xf32>
    %18 = vector.broadcast %17 : vector<16x1xf32> to vector<16x32xf32>
    %19 = arith.subf %13, %18 : vector<16x32xf32>
    %20 = arith.mulf %19, %19 : vector<16x32xf32>
    %cst_13 = arith.constant dense<0.000000e+00> : vector<16xf32>
    %21 = vector.multi_reduction <add>, %20, %cst_13 [1] : vector<16x32xf32> to vector<16xf32>
    %22 = vector.shape_cast %21 : vector<16xf32> to vector<16x1xf32>
    %cst_14 = arith.constant 0.0322580636 : f32
    %23 = vector.broadcast %cst_14 : f32 to vector<16x1xf32>
    %24 = arith.mulf %22, %23 : vector<16x1xf32>
    %25 = vector.broadcast %17 : vector<16x1xf32> to vector<16x32xf32>
    %26 = arith.subf %13, %25 : vector<16x32xf32>
    %cst_15 = arith.constant 9.99999993E-9 : f32
    %27 = vector.broadcast %cst_15 : f32 to vector<16x1xf32>
    %28 = arith.addf %24, %27 : vector<16x1xf32>
    %29 = math.rsqrt %28 : vector<16x1xf32>
    %30 = vector.broadcast %29 : vector<16x1xf32> to vector<16x32xf32>
    %31 = arith.mulf %26, %30 : vector<16x32xf32>
    %c0_16 = arith.constant 0 : index
    %32 = memref.load %arg6[%c0_16] : memref<1xf32, #tpu.memory_space<smem>>
    %33 = vector.broadcast %32 : f32 to vector<16x32xf32>
    %34 = arith.mulf %33, %31 : vector<16x32xf32>
    %c0_17 = arith.constant 0 : index
    %35 = memref.load %arg7[%c0_17] : memref<1xf32, #tpu.memory_space<smem>>
    %36 = vector.broadcast %35 : f32 to vector<16x32xf32>
    %37 = arith.addf %34, %36 : vector<16x32xf32>
    %c0_18 = arith.constant 0 : index
    %c0_19 = arith.constant 0 : index
    %38 = vector.load %arg8[%c0_18, %c0_19] : memref<16x32xf32, #tpu.memory_space<vmem>>, vector<16x32xf32>
    tpu.vector_store %arg8[%c0_18, %c0_19], %37 {strides = array<i32>} : memref<16x32xf32, #tpu.memory_space<vmem>>, vector<16x32xf32>,
    return
  }
  func.func @transform_0(%arg0: i32) -> (i32, i32) {
    %c0_i32 = arith.constant 0 : i32
    %c0_i32_0 = arith.constant 0 : i32
    return %arg0, %c0_i32 : i32, i32
  }
  func.func @transform_1(%arg0: i32) -> (i32, i32) {
    %c0_i32 = arith.constant 0 : i32
    %c0_i32_0 = arith.constant 0 : i32
    %c0_i32_1 = arith.constant 0 : i32
    return %c0_i32, %c0_i32_0 : i32, i32
  }
  func.func @transform_2(%arg0: i32) -> (i32, i32) {
    %c0_i32 = arith.constant 0 : i32
    %c0_i32_0 = arith.constant 0 : i32
    %c0_i32_1 = arith.constant 0 : i32
    return %c0_i32, %c0_i32_0 : i32, i32
  }
  func.func @transform_3(%arg0: i32) -> (i32, i32) {
    %c0_i32 = arith.constant 0 : i32
    %c0_i32_0 = arith.constant 0 : i32
    %c0_i32_1 = arith.constant 0 : i32
    return %c0_i32, %c0_i32_0 : i32, i32
  }
  func.func @transform_4(%arg0: i32) -> (i32, i32) {
    %c0_i32 = arith.constant 0 : i32
    %c0_i32_0 = arith.constant 0 : i32
    %c0_i32_1 = arith.constant 0 : i32
    return %c0_i32, %c0_i32_0 : i32, i32
  }
  func.func @transform_5(%arg0: i32) -> i32 {
    %c0_i32 = arith.constant 0 : i32
    %c0_i32_0 = arith.constant 0 : i32
    return %c0_i32 : i32
  }
  func.func @transform_6(%arg0: i32) -> i32 {
    %c0_i32 = arith.constant 0 : i32
    %c0_i32_0 = arith.constant 0 : i32
    return %c0_i32 : i32
  }
  func.func @transform_7(%arg0: i32) -> (i32, i32) {
    %c0_i32 = arith.constant 0 : i32
    %c0_i32_0 = arith.constant 0 : i32
    return %arg0, %c0_i32 : i32, i32
  }
}

module attributes {stable_mosaic.version = 11 : i64} {
  func.func @_attn_kernel(%arg0: i32, %arg1: i32, %arg2: memref<1x8x64xf32, #tpu.memory_space<vmem>>, %arg3: memref<1x8x128xf32, #tpu.memory_space<vmem>>, %arg4: memref<1x8x32xf32, #tpu.memory_space<vmem>>, %arg5: memref<64x32xf32, #tpu.memory_space<vmem>>, %arg6: memref<8x1xf32, #tpu.memory_space<smem>>, %arg7: memref<8x1xf32, #tpu.memory_space<smem>>, %arg8: memref<1xf32, #tpu.memory_space<smem>>, %arg9: memref<1xf32, #tpu.memory_space<smem>>, %arg10: memref<1x8x32xf32, #tpu.memory_space<vmem>>, %arg11: memref<8x64xf32, #tpu.memory_space<vmem>>) attributes {dimension_semantics = [#tpu.dimension_semantics<parallel>, #tpu.dimension_semantics<parallel>], iteration_bounds = array<i64: 2, 1>, scalar_prefetch = 0 : i64, scratch_operands = 1 : i64, tpu.core_type = #tpu.core_type<tc>, window_params = [{transform_indices = @transform_0, window_bounds = array<i64: 1, 8, 64>}, {transform_indices = @transform_1, window_bounds = array<i64: 1, 8, 128>}, {transform_indices = @transform_2, window_bounds = array<i64: 1, 8, 32>}, {pipeline_mode = #tpu.pipeline_mode<synchronous>, transform_indices = @transform_3, window_bounds = array<i64: 64, 32>}, {transform_indices = @transform_4, window_bounds = array<i64: 8, 1>}, {transform_indices = @transform_5, window_bounds = array<i64: 8, 1>}, {transform_indices = @transform_6, window_bounds = array<i64: 1>}, {transform_indices = @transform_7, window_bounds = array<i64: 1>}, {transform_indices = @transform_8, window_bounds = array<i64: 1, 8, 32>}]} {
    %c0 = arith.constant 0 : index
    %c0_0 = arith.constant 0 : index
    %c0_1 = arith.constant 0 : index
    %0 = vector.load %arg2[%c0, %c0_0, %c0_1] : memref<1x8x64xf32, #tpu.memory_space<vmem>>, vector<1x8x64xf32>
    %1 = vector.shape_cast %0 : vector<1x8x64xf32> to vector<8x64xf32>
    %c0_2 = arith.constant 0 : index
    %c0_3 = arith.constant 0 : index
    %c0_4 = arith.constant 0 : index
    %2 = vector.load %arg3[%c0_2, %c0_3, %c0_4] : memref<1x8x128xf32, #tpu.memory_space<vmem>>, vector<1x8x128xf32>
    %3 = vector.shape_cast %2 : vector<1x8x128xf32> to vector<8x128xf32>
    %c0_5 = arith.constant 0 : index
    %c0_6 = arith.constant 0 : index
    %c0_7 = arith.constant 0 : index
    %4 = vector.load %arg4[%c0_5, %c0_6, %c0_7] : memref<1x8x32xf32, #tpu.memory_space<vmem>>, vector<1x8x32xf32>
    %5 = vector.shape_cast %4 : vector<1x8x32xf32> to vector<8x32xf32>
    %c0_8 = arith.constant 0 : index
    %c0_9 = arith.constant 0 : index
    %6 = vector.load %arg5[%c0_8, %c0_9] : memref<64x32xf32, #tpu.memory_space<vmem>>, vector<64x32xf32>
    %7 = vector.extract_strided_slice %1 {offsets = [0, 0], sizes = [8, 8], strides = [1, 1]} : vector<8x64xf32> to vector<8x8xf32>
    %8 = vector.extract_strided_slice %3 {offsets = [0, 0], sizes = [8, 8], strides = [1, 1]} : vector<8x128xf32> to vector<8x8xf32>
    %9 = vector.extract_strided_slice %3 {offsets = [0, 64], sizes = [8, 8], strides = [1, 1]} : vector<8x128xf32> to vector<8x8xf32>
    %cst = arith.constant dense<0.000000e+00> : vector<8x8xf32>
    %10 = tpu.matmul %7, %8, %cst {dimension_numbers = #tpu.dot_dimension_numbers<[1], [1], [0], [0], [0, 0, 1, 0], [], []>} : vector<8x8xf32>, vector<8x8xf32>, vector<8x8xf32> -> vector<8x8xf32>
    %cst_10 = arith.constant dense<0.000000e+00> : vector<8xf32>
    %11 = vector.multi_reduction <add>, %10, %cst_10 [1] : vector<8x8xf32> to vector<8xf32>
    %12 = vector.shape_cast %11 : vector<8xf32> to vector<8x1xf32>
    %13 = arith.mulf %10, %10 : vector<8x8xf32>
    %cst_11 = arith.constant dense<0.000000e+00> : vector<8xf32>
    %14 = vector.multi_reduction <add>, %13, %cst_11 [1] : vector<8x8xf32> to vector<8xf32>
    %15 = vector.shape_cast %14 : vector<8xf32> to vector<8x1xf32>
    %cst_12 = arith.constant 1.250000e-01 : f32
    %16 = vector.broadcast %cst_12 : f32 to vector<8x1xf32>
    %17 = arith.mulf %12, %16 : vector<8x1xf32>
    %18 = arith.mulf %17, %12 : vector<8x1xf32>
    %19 = arith.subf %15, %18 : vector<8x1xf32>
    %cst_13 = arith.constant 0.142857149 : f32
    %20 = vector.broadcast %cst_13 : f32 to vector<8x1xf32>
    %21 = arith.mulf %19, %20 : vector<8x1xf32>
    %cst_14 = arith.constant 0.000000e+00 : f32
    %22 = vector.broadcast %cst_14 : f32 to vector<8x1xf32>
    %23 = arith.maximumf %21, %22 : vector<8x1xf32>
    %c0_15 = arith.constant 0 : index
    %c0_16 = arith.constant 0 : index
    %24 = memref.load %arg6[%c0_15, %c0_16] : memref<8x1xf32, #tpu.memory_space<smem>>
    %cst_17 = arith.constant 9.99999993E-9 : f32
    %25 = vector.broadcast %cst_17 : f32 to vector<8x1xf32>
    %26 = arith.addf %23, %25 : vector<8x1xf32>
    %27 = math.rsqrt %26 : vector<8x1xf32>
    %28 = vector.broadcast %24 : f32 to vector<8x1xf32>
    %29 = arith.mulf %28, %27 : vector<8x1xf32>
    %c0_18 = arith.constant 0 : index
    %c0_19 = arith.constant 0 : index
    %30 = memref.load %arg7[%c0_18, %c0_19] : memref<8x1xf32, #tpu.memory_space<smem>>
    %31 = arith.mulf %29, %17 : vector<8x1xf32>
    %32 = vector.broadcast %30 : f32 to vector<8x1xf32>
    %33 = arith.subf %32, %31 : vector<8x1xf32>
    %34 = vector.broadcast %29 : vector<8x1xf32> to vector<8x8xf32>
    %35 = arith.mulf %10, %34 : vector<8x8xf32>
    %36 = vector.broadcast %33 : vector<8x1xf32> to vector<8x8xf32>
    %37 = arith.addf %35, %36 : vector<8x8xf32>
    %cst_20 = arith.constant dense<0xFF800000> : vector<8xf32>
    %38 = vector.multi_reduction <maximumf>, %37, %cst_20 [1] : vector<8x8xf32> to vector<8xf32>
    %39 = vector.shape_cast %38 : vector<8xf32> to vector<8x1xf32>
    %40 = vector.broadcast %39 : vector<8x1xf32> to vector<8x8xf32>
    %41 = arith.subf %37, %40 : vector<8x8xf32>
    %42 = math.exp %41 : vector<8x8xf32>
    %cst_21 = arith.constant dense<0.000000e+00> : vector<8xf32>
    %43 = vector.multi_reduction <add>, %42, %cst_21 [1] : vector<8x8xf32> to vector<8xf32>
    %44 = vector.shape_cast %43 : vector<8xf32> to vector<8x1xf32>
    %45 = tpu.reciprocal %44 {approx = true} : vector<8x1xf32> -> vector<8x1xf32>
    %46 = vector.broadcast %45 : vector<8x1xf32> to vector<8x8xf32>
    %47 = arith.mulf %42, %46 : vector<8x8xf32>
    %cst_22 = arith.constant dense<0.000000e+00> : vector<8x8xf32>
    %48 = tpu.matmul %47, %9, %cst_22 {dimension_numbers = #tpu.dot_dimension_numbers<[1], [0], [0], [1], [0, 0, 1, 1], [], []>} : vector<8x8xf32>, vector<8x8xf32>, vector<8x8xf32> -> vector<8x8xf32>
    %c0_23 = arith.constant 0 : index
    %c0_24 = arith.constant 0 : index
    %49 = vector.load %arg11[%c0_23, %c0_24] : memref<8x64xf32, #tpu.memory_space<vmem>>, vector<8x8xf32>
    tpu.vector_store %arg11[%c0_23, %c0_24], %48 {strides = array<i32>} : memref<8x64xf32, #tpu.memory_space<vmem>>, vector<8x8xf32>,
    %50 = vector.extract_strided_slice %1 {offsets = [0, 8], sizes = [8, 8], strides = [1, 1]} : vector<8x64xf32> to vector<8x8xf32>
    %51 = vector.extract_strided_slice %3 {offsets = [0, 8], sizes = [8, 8], strides = [1, 1]} : vector<8x128xf32> to vector<8x8xf32>
    %52 = vector.extract_strided_slice %3 {offsets = [0, 72], sizes = [8, 8], strides = [1, 1]} : vector<8x128xf32> to vector<8x8xf32>
    %cst_25 = arith.constant dense<0.000000e+00> : vector<8x8xf32>
    %53 = tpu.matmul %50, %51, %cst_25 {dimension_numbers = #tpu.dot_dimension_numbers<[1], [1], [0], [0], [0, 0, 1, 0], [], []>} : vector<8x8xf32>, vector<8x8xf32>, vector<8x8xf32> -> vector<8x8xf32>
    %cst_26 = arith.constant dense<0.000000e+00> : vector<8xf32>
    %54 = vector.multi_reduction <add>, %53, %cst_26 [1] : vector<8x8xf32> to vector<8xf32>
    %55 = vector.shape_cast %54 : vector<8xf32> to vector<8x1xf32>
    %56 = arith.mulf %53, %53 : vector<8x8xf32>
    %cst_27 = arith.constant dense<0.000000e+00> : vector<8xf32>
    %57 = vector.multi_reduction <add>, %56, %cst_27 [1] : vector<8x8xf32> to vector<8xf32>
    %58 = vector.shape_cast %57 : vector<8xf32> to vector<8x1xf32>
    %cst_28 = arith.constant 1.250000e-01 : f32
    %59 = vector.broadcast %cst_28 : f32 to vector<8x1xf32>
    %60 = arith.mulf %55, %59 : vector<8x1xf32>
    %61 = arith.mulf %60, %55 : vector<8x1xf32>
    %62 = arith.subf %58, %61 : vector<8x1xf32>
    %cst_29 = arith.constant 0.142857149 : f32
    %63 = vector.broadcast %cst_29 : f32 to vector<8x1xf32>
    %64 = arith.mulf %62, %63 : vector<8x1xf32>
    %cst_30 = arith.constant 0.000000e+00 : f32
    %65 = vector.broadcast %cst_30 : f32 to vector<8x1xf32>
    %66 = arith.maximumf %64, %65 : vector<8x1xf32>
    %c1 = arith.constant 1 : index
    %c0_31 = arith.constant 0 : index
    %67 = memref.load %arg6[%c1, %c0_31] : memref<8x1xf32, #tpu.memory_space<smem>>
    %cst_32 = arith.constant 9.99999993E-9 : f32
    %68 = vector.broadcast %cst_32 : f32 to vector<8x1xf32>
    %69 = arith.addf %66, %68 : vector<8x1xf32>
    %70 = math.rsqrt %69 : vector<8x1xf32>
    %71 = vector.broadcast %67 : f32 to vector<8x1xf32>
    %72 = arith.mulf %71, %70 : vector<8x1xf32>
    %c1_33 = arith.constant 1 : index
    %c0_34 = arith.constant 0 : index
    %73 = memref.load %arg7[%c1_33, %c0_34] : memref<8x1xf32, #tpu.memory_space<smem>>
    %74 = arith.mulf %72, %60 : vector<8x1xf32>
    %75 = vector.broadcast %73 : f32 to vector<8x1xf32>
    %76 = arith.subf %75, %74 : vector<8x1xf32>
    %77 = vector.broadcast %72 : vector<8x1xf32> to vector<8x8xf32>
    %78 = arith.mulf %53, %77 : vector<8x8xf32>
    %79 = vector.broadcast %76 : vector<8x1xf32> to vector<8x8xf32>
    %80 = arith.addf %78, %79 : vector<8x8xf32>
    %cst_35 = arith.constant dense<0xFF800000> : vector<8xf32>
    %81 = vector.multi_reduction <maximumf>, %80, %cst_35 [1] : vector<8x8xf32> to vector<8xf32>
    %82 = vector.shape_cast %81 : vector<8xf32> to vector<8x1xf32>
    %83 = vector.broadcast %82 : vector<8x1xf32> to vector<8x8xf32>
    %84 = arith.subf %80, %83 : vector<8x8xf32>
    %85 = math.exp %84 : vector<8x8xf32>
    %cst_36 = arith.constant dense<0.000000e+00> : vector<8xf32>
    %86 = vector.multi_reduction <add>, %85, %cst_36 [1] : vector<8x8xf32> to vector<8xf32>
    %87 = vector.shape_cast %86 : vector<8xf32> to vector<8x1xf32>
    %88 = tpu.reciprocal %87 {approx = true} : vector<8x1xf32> -> vector<8x1xf32>
    %89 = vector.broadcast %88 : vector<8x1xf32> to vector<8x8xf32>
    %90 = arith.mulf %85, %89 : vector<8x8xf32>
    %cst_37 = arith.constant dense<0.000000e+00> : vector<8x8xf32>
    %91 = tpu.matmul %90, %52, %cst_37 {dimension_numbers = #tpu.dot_dimension_numbers<[1], [0], [0], [1], [0, 0, 1, 1], [], []>} : vector<8x8xf32>, vector<8x8xf32>, vector<8x8xf32> -> vector<8x8xf32>
    %c0_38 = arith.constant 0 : index
    %c8 = arith.constant 8 : index
    %92 = vector.load %arg11[%c0_38, %c8] : memref<8x64xf32, #tpu.memory_space<vmem>>, vector<8x8xf32>
    tpu.vector_store %arg11[%c0_38, %c8], %91 {strides = array<i32>} : memref<8x64xf32, #tpu.memory_space<vmem>>, vector<8x8xf32>,
    %93 = vector.extract_strided_slice %1 {offsets = [0, 16], sizes = [8, 8], strides = [1, 1]} : vector<8x64xf32> to vector<8x8xf32>
    %94 = vector.extract_strided_slice %3 {offsets = [0, 16], sizes = [8, 8], strides = [1, 1]} : vector<8x128xf32> to vector<8x8xf32>
    %95 = vector.extract_strided_slice %3 {offsets = [0, 80], sizes = [8, 8], strides = [1, 1]} : vector<8x128xf32> to vector<8x8xf32>
    %cst_39 = arith.constant dense<0.000000e+00> : vector<8x8xf32>
    %96 = tpu.matmul %93, %94, %cst_39 {dimension_numbers = #tpu.dot_dimension_numbers<[1], [1], [0], [0], [0, 0, 1, 0], [], []>} : vector<8x8xf32>, vector<8x8xf32>, vector<8x8xf32> -> vector<8x8xf32>
    %cst_40 = arith.constant dense<0.000000e+00> : vector<8xf32>
    %97 = vector.multi_reduction <add>, %96, %cst_40 [1] : vector<8x8xf32> to vector<8xf32>
    %98 = vector.shape_cast %97 : vector<8xf32> to vector<8x1xf32>
    %99 = arith.mulf %96, %96 : vector<8x8xf32>
    %cst_41 = arith.constant dense<0.000000e+00> : vector<8xf32>
    %100 = vector.multi_reduction <add>, %99, %cst_41 [1] : vector<8x8xf32> to vector<8xf32>
    %101 = vector.shape_cast %100 : vector<8xf32> to vector<8x1xf32>
    %cst_42 = arith.constant 1.250000e-01 : f32
    %102 = vector.broadcast %cst_42 : f32 to vector<8x1xf32>
    %103 = arith.mulf %98, %102 : vector<8x1xf32>
    %104 = arith.mulf %103, %98 : vector<8x1xf32>
    %105 = arith.subf %101, %104 : vector<8x1xf32>
    %cst_43 = arith.constant 0.142857149 : f32
    %106 = vector.broadcast %cst_43 : f32 to vector<8x1xf32>
    %107 = arith.mulf %105, %106 : vector<8x1xf32>
    %cst_44 = arith.constant 0.000000e+00 : f32
    %108 = vector.broadcast %cst_44 : f32 to vector<8x1xf32>
    %109 = arith.maximumf %107, %108 : vector<8x1xf32>
    %c2 = arith.constant 2 : index
    %c0_45 = arith.constant 0 : index
    %110 = memref.load %arg6[%c2, %c0_45] : memref<8x1xf32, #tpu.memory_space<smem>>
    %cst_46 = arith.constant 9.99999993E-9 : f32
    %111 = vector.broadcast %cst_46 : f32 to vector<8x1xf32>
    %112 = arith.addf %109, %111 : vector<8x1xf32>
    %113 = math.rsqrt %112 : vector<8x1xf32>
    %114 = vector.broadcast %110 : f32 to vector<8x1xf32>
    %115 = arith.mulf %114, %113 : vector<8x1xf32>
    %c2_47 = arith.constant 2 : index
    %c0_48 = arith.constant 0 : index
    %116 = memref.load %arg7[%c2_47, %c0_48] : memref<8x1xf32, #tpu.memory_space<smem>>
    %117 = arith.mulf %115, %103 : vector<8x1xf32>
    %118 = vector.broadcast %116 : f32 to vector<8x1xf32>
    %119 = arith.subf %118, %117 : vector<8x1xf32>
    %120 = vector.broadcast %115 : vector<8x1xf32> to vector<8x8xf32>
    %121 = arith.mulf %96, %120 : vector<8x8xf32>
    %122 = vector.broadcast %119 : vector<8x1xf32> to vector<8x8xf32>
    %123 = arith.addf %121, %122 : vector<8x8xf32>
    %cst_49 = arith.constant dense<0xFF800000> : vector<8xf32>
    %124 = vector.multi_reduction <maximumf>, %123, %cst_49 [1] : vector<8x8xf32> to vector<8xf32>
    %125 = vector.shape_cast %124 : vector<8xf32> to vector<8x1xf32>
    %126 = vector.broadcast %125 : vector<8x1xf32> to vector<8x8xf32>
    %127 = arith.subf %123, %126 : vector<8x8xf32>
    %128 = math.exp %127 : vector<8x8xf32>
    %cst_50 = arith.constant dense<0.000000e+00> : vector<8xf32>
    %129 = vector.multi_reduction <add>, %128, %cst_50 [1] : vector<8x8xf32> to vector<8xf32>
    %130 = vector.shape_cast %129 : vector<8xf32> to vector<8x1xf32>
    %131 = tpu.reciprocal %130 {approx = true} : vector<8x1xf32> -> vector<8x1xf32>
    %132 = vector.broadcast %131 : vector<8x1xf32> to vector<8x8xf32>
    %133 = arith.mulf %128, %132 : vector<8x8xf32>
    %cst_51 = arith.constant dense<0.000000e+00> : vector<8x8xf32>
    %134 = tpu.matmul %133, %95, %cst_51 {dimension_numbers = #tpu.dot_dimension_numbers<[1], [0], [0], [1], [0, 0, 1, 1], [], []>} : vector<8x8xf32>, vector<8x8xf32>, vector<8x8xf32> -> vector<8x8xf32>
    %c0_52 = arith.constant 0 : index
    %c16 = arith.constant 16 : index
    %135 = vector.load %arg11[%c0_52, %c16] : memref<8x64xf32, #tpu.memory_space<vmem>>, vector<8x8xf32>
    tpu.vector_store %arg11[%c0_52, %c16], %134 {strides = array<i32>} : memref<8x64xf32, #tpu.memory_space<vmem>>, vector<8x8xf32>,
    %136 = vector.extract_strided_slice %1 {offsets = [0, 24], sizes = [8, 8], strides = [1, 1]} : vector<8x64xf32> to vector<8x8xf32>
    %137 = vector.extract_strided_slice %3 {offsets = [0, 24], sizes = [8, 8], strides = [1, 1]} : vector<8x128xf32> to vector<8x8xf32>
    %138 = vector.extract_strided_slice %3 {offsets = [0, 88], sizes = [8, 8], strides = [1, 1]} : vector<8x128xf32> to vector<8x8xf32>
    %cst_53 = arith.constant dense<0.000000e+00> : vector<8x8xf32>
    %139 = tpu.matmul %136, %137, %cst_53 {dimension_numbers = #tpu.dot_dimension_numbers<[1], [1], [0], [0], [0, 0, 1, 0], [], []>} : vector<8x8xf32>, vector<8x8xf32>, vector<8x8xf32> -> vector<8x8xf32>
    %cst_54 = arith.constant dense<0.000000e+00> : vector<8xf32>
    %140 = vector.multi_reduction <add>, %139, %cst_54 [1] : vector<8x8xf32> to vector<8xf32>
    %141 = vector.shape_cast %140 : vector<8xf32> to vector<8x1xf32>
    %142 = arith.mulf %139, %139 : vector<8x8xf32>
    %cst_55 = arith.constant dense<0.000000e+00> : vector<8xf32>
    %143 = vector.multi_reduction <add>, %142, %cst_55 [1] : vector<8x8xf32> to vector<8xf32>
    %144 = vector.shape_cast %143 : vector<8xf32> to vector<8x1xf32>
    %cst_56 = arith.constant 1.250000e-01 : f32
    %145 = vector.broadcast %cst_56 : f32 to vector<8x1xf32>
    %146 = arith.mulf %141, %145 : vector<8x1xf32>
    %147 = arith.mulf %146, %141 : vector<8x1xf32>
    %148 = arith.subf %144, %147 : vector<8x1xf32>
    %cst_57 = arith.constant 0.142857149 : f32
    %149 = vector.broadcast %cst_57 : f32 to vector<8x1xf32>
    %150 = arith.mulf %148, %149 : vector<8x1xf32>
    %cst_58 = arith.constant 0.000000e+00 : f32
    %151 = vector.broadcast %cst_58 : f32 to vector<8x1xf32>
    %152 = arith.maximumf %150, %151 : vector<8x1xf32>
    %c3 = arith.constant 3 : index
    %c0_59 = arith.constant 0 : index
    %153 = memref.load %arg6[%c3, %c0_59] : memref<8x1xf32, #tpu.memory_space<smem>>
    %cst_60 = arith.constant 9.99999993E-9 : f32
    %154 = vector.broadcast %cst_60 : f32 to vector<8x1xf32>
    %155 = arith.addf %152, %154 : vector<8x1xf32>
    %156 = math.rsqrt %155 : vector<8x1xf32>
    %157 = vector.broadcast %153 : f32 to vector<8x1xf32>
    %158 = arith.mulf %157, %156 : vector<8x1xf32>
    %c3_61 = arith.constant 3 : index
    %c0_62 = arith.constant 0 : index
    %159 = memref.load %arg7[%c3_61, %c0_62] : memref<8x1xf32, #tpu.memory_space<smem>>
    %160 = arith.mulf %158, %146 : vector<8x1xf32>
    %161 = vector.broadcast %159 : f32 to vector<8x1xf32>
    %162 = arith.subf %161, %160 : vector<8x1xf32>
    %163 = vector.broadcast %158 : vector<8x1xf32> to vector<8x8xf32>
    %164 = arith.mulf %139, %163 : vector<8x8xf32>
    %165 = vector.broadcast %162 : vector<8x1xf32> to vector<8x8xf32>
    %166 = arith.addf %164, %165 : vector<8x8xf32>
    %cst_63 = arith.constant dense<0xFF800000> : vector<8xf32>
    %167 = vector.multi_reduction <maximumf>, %166, %cst_63 [1] : vector<8x8xf32> to vector<8xf32>
    %168 = vector.shape_cast %167 : vector<8xf32> to vector<8x1xf32>
    %169 = vector.broadcast %168 : vector<8x1xf32> to vector<8x8xf32>
    %170 = arith.subf %166, %169 : vector<8x8xf32>
    %171 = math.exp %170 : vector<8x8xf32>
    %cst_64 = arith.constant dense<0.000000e+00> : vector<8xf32>
    %172 = vector.multi_reduction <add>, %171, %cst_64 [1] : vector<8x8xf32> to vector<8xf32>
    %173 = vector.shape_cast %172 : vector<8xf32> to vector<8x1xf32>
    %174 = tpu.reciprocal %173 {approx = true} : vector<8x1xf32> -> vector<8x1xf32>
    %175 = vector.broadcast %174 : vector<8x1xf32> to vector<8x8xf32>
    %176 = arith.mulf %171, %175 : vector<8x8xf32>
    %cst_65 = arith.constant dense<0.000000e+00> : vector<8x8xf32>
    %177 = tpu.matmul %176, %138, %cst_65 {dimension_numbers = #tpu.dot_dimension_numbers<[1], [0], [0], [1], [0, 0, 1, 1], [], []>} : vector<8x8xf32>, vector<8x8xf32>, vector<8x8xf32> -> vector<8x8xf32>
    %c0_66 = arith.constant 0 : index
    %c24 = arith.constant 24 : index
    %178 = vector.load %arg11[%c0_66, %c24] : memref<8x64xf32, #tpu.memory_space<vmem>>, vector<8x8xf32>
    tpu.vector_store %arg11[%c0_66, %c24], %177 {strides = array<i32>} : memref<8x64xf32, #tpu.memory_space<vmem>>, vector<8x8xf32>,
    %179 = vector.extract_strided_slice %1 {offsets = [0, 32], sizes = [8, 8], strides = [1, 1]} : vector<8x64xf32> to vector<8x8xf32>
    %180 = vector.extract_strided_slice %3 {offsets = [0, 32], sizes = [8, 8], strides = [1, 1]} : vector<8x128xf32> to vector<8x8xf32>
    %181 = vector.extract_strided_slice %3 {offsets = [0, 96], sizes = [8, 8], strides = [1, 1]} : vector<8x128xf32> to vector<8x8xf32>
    %cst_67 = arith.constant dense<0.000000e+00> : vector<8x8xf32>
    %182 = tpu.matmul %179, %180, %cst_67 {dimension_numbers = #tpu.dot_dimension_numbers<[1], [1], [0], [0], [0, 0, 1, 0], [], []>} : vector<8x8xf32>, vector<8x8xf32>, vector<8x8xf32> -> vector<8x8xf32>
    %cst_68 = arith.constant dense<0.000000e+00> : vector<8xf32>
    %183 = vector.multi_reduction <add>, %182, %cst_68 [1] : vector<8x8xf32> to vector<8xf32>
    %184 = vector.shape_cast %183 : vector<8xf32> to vector<8x1xf32>
    %185 = arith.mulf %182, %182 : vector<8x8xf32>
    %cst_69 = arith.constant dense<0.000000e+00> : vector<8xf32>
    %186 = vector.multi_reduction <add>, %185, %cst_69 [1] : vector<8x8xf32> to vector<8xf32>
    %187 = vector.shape_cast %186 : vector<8xf32> to vector<8x1xf32>
    %cst_70 = arith.constant 1.250000e-01 : f32
    %188 = vector.broadcast %cst_70 : f32 to vector<8x1xf32>
    %189 = arith.mulf %184, %188 : vector<8x1xf32>
    %190 = arith.mulf %189, %184 : vector<8x1xf32>
    %191 = arith.subf %187, %190 : vector<8x1xf32>
    %cst_71 = arith.constant 0.142857149 : f32
    %192 = vector.broadcast %cst_71 : f32 to vector<8x1xf32>
    %193 = arith.mulf %191, %192 : vector<8x1xf32>
    %cst_72 = arith.constant 0.000000e+00 : f32
    %194 = vector.broadcast %cst_72 : f32 to vector<8x1xf32>
    %195 = arith.maximumf %193, %194 : vector<8x1xf32>
    %c4 = arith.constant 4 : index
    %c0_73 = arith.constant 0 : index
    %196 = memref.load %arg6[%c4, %c0_73] : memref<8x1xf32, #tpu.memory_space<smem>>
    %cst_74 = arith.constant 9.99999993E-9 : f32
    %197 = vector.broadcast %cst_74 : f32 to vector<8x1xf32>
    %198 = arith.addf %195, %197 : vector<8x1xf32>
    %199 = math.rsqrt %198 : vector<8x1xf32>
    %200 = vector.broadcast %196 : f32 to vector<8x1xf32>
    %201 = arith.mulf %200, %199 : vector<8x1xf32>
    %c4_75 = arith.constant 4 : index
    %c0_76 = arith.constant 0 : index
    %202 = memref.load %arg7[%c4_75, %c0_76] : memref<8x1xf32, #tpu.memory_space<smem>>
    %203 = arith.mulf %201, %189 : vector<8x1xf32>
    %204 = vector.broadcast %202 : f32 to vector<8x1xf32>
    %205 = arith.subf %204, %203 : vector<8x1xf32>
    %206 = vector.broadcast %201 : vector<8x1xf32> to vector<8x8xf32>
    %207 = arith.mulf %182, %206 : vector<8x8xf32>
    %208 = vector.broadcast %205 : vector<8x1xf32> to vector<8x8xf32>
    %209 = arith.addf %207, %208 : vector<8x8xf32>
    %cst_77 = arith.constant dense<0xFF800000> : vector<8xf32>
    %210 = vector.multi_reduction <maximumf>, %209, %cst_77 [1] : vector<8x8xf32> to vector<8xf32>
    %211 = vector.shape_cast %210 : vector<8xf32> to vector<8x1xf32>
    %212 = vector.broadcast %211 : vector<8x1xf32> to vector<8x8xf32>
    %213 = arith.subf %209, %212 : vector<8x8xf32>
    %214 = math.exp %213 : vector<8x8xf32>
    %cst_78 = arith.constant dense<0.000000e+00> : vector<8xf32>
    %215 = vector.multi_reduction <add>, %214, %cst_78 [1] : vector<8x8xf32> to vector<8xf32>
    %216 = vector.shape_cast %215 : vector<8xf32> to vector<8x1xf32>
    %217 = tpu.reciprocal %216 {approx = true} : vector<8x1xf32> -> vector<8x1xf32>
    %218 = vector.broadcast %217 : vector<8x1xf32> to vector<8x8xf32>
    %219 = arith.mulf %214, %218 : vector<8x8xf32>
    %cst_79 = arith.constant dense<0.000000e+00> : vector<8x8xf32>
    %220 = tpu.matmul %219, %181, %cst_79 {dimension_numbers = #tpu.dot_dimension_numbers<[1], [0], [0], [1], [0, 0, 1, 1], [], []>} : vector<8x8xf32>, vector<8x8xf32>, vector<8x8xf32> -> vector<8x8xf32>
    %c0_80 = arith.constant 0 : index
    %c32 = arith.constant 32 : index
    %221 = vector.load %arg11[%c0_80, %c32] : memref<8x64xf32, #tpu.memory_space<vmem>>, vector<8x8xf32>
    tpu.vector_store %arg11[%c0_80, %c32], %220 {strides = array<i32>} : memref<8x64xf32, #tpu.memory_space<vmem>>, vector<8x8xf32>,
    %222 = vector.extract_strided_slice %1 {offsets = [0, 40], sizes = [8, 8], strides = [1, 1]} : vector<8x64xf32> to vector<8x8xf32>
    %223 = vector.extract_strided_slice %3 {offsets = [0, 40], sizes = [8, 8], strides = [1, 1]} : vector<8x128xf32> to vector<8x8xf32>
    %224 = vector.extract_strided_slice %3 {offsets = [0, 104], sizes = [8, 8], strides = [1, 1]} : vector<8x128xf32> to vector<8x8xf32>
    %cst_81 = arith.constant dense<0.000000e+00> : vector<8x8xf32>
    %225 = tpu.matmul %222, %223, %cst_81 {dimension_numbers = #tpu.dot_dimension_numbers<[1], [1], [0], [0], [0, 0, 1, 0], [], []>} : vector<8x8xf32>, vector<8x8xf32>, vector<8x8xf32> -> vector<8x8xf32>
    %cst_82 = arith.constant dense<0.000000e+00> : vector<8xf32>
    %226 = vector.multi_reduction <add>, %225, %cst_82 [1] : vector<8x8xf32> to vector<8xf32>
    %227 = vector.shape_cast %226 : vector<8xf32> to vector<8x1xf32>
    %228 = arith.mulf %225, %225 : vector<8x8xf32>
    %cst_83 = arith.constant dense<0.000000e+00> : vector<8xf32>
    %229 = vector.multi_reduction <add>, %228, %cst_83 [1] : vector<8x8xf32> to vector<8xf32>
    %230 = vector.shape_cast %229 : vector<8xf32> to vector<8x1xf32>
    %cst_84 = arith.constant 1.250000e-01 : f32
    %231 = vector.broadcast %cst_84 : f32 to vector<8x1xf32>
    %232 = arith.mulf %227, %231 : vector<8x1xf32>
    %233 = arith.mulf %232, %227 : vector<8x1xf32>
    %234 = arith.subf %230, %233 : vector<8x1xf32>
    %cst_85 = arith.constant 0.142857149 : f32
    %235 = vector.broadcast %cst_85 : f32 to vector<8x1xf32>
    %236 = arith.mulf %234, %235 : vector<8x1xf32>
    %cst_86 = arith.constant 0.000000e+00 : f32
    %237 = vector.broadcast %cst_86 : f32 to vector<8x1xf32>
    %238 = arith.maximumf %236, %237 : vector<8x1xf32>
    %c5 = arith.constant 5 : index
    %c0_87 = arith.constant 0 : index
    %239 = memref.load %arg6[%c5, %c0_87] : memref<8x1xf32, #tpu.memory_space<smem>>
    %cst_88 = arith.constant 9.99999993E-9 : f32
    %240 = vector.broadcast %cst_88 : f32 to vector<8x1xf32>
    %241 = arith.addf %238, %240 : vector<8x1xf32>
    %242 = math.rsqrt %241 : vector<8x1xf32>
    %243 = vector.broadcast %239 : f32 to vector<8x1xf32>
    %244 = arith.mulf %243, %242 : vector<8x1xf32>
    %c5_89 = arith.constant 5 : index
    %c0_90 = arith.constant 0 : index
    %245 = memref.load %arg7[%c5_89, %c0_90] : memref<8x1xf32, #tpu.memory_space<smem>>
    %246 = arith.mulf %244, %232 : vector<8x1xf32>
    %247 = vector.broadcast %245 : f32 to vector<8x1xf32>
    %248 = arith.subf %247, %246 : vector<8x1xf32>
    %249 = vector.broadcast %244 : vector<8x1xf32> to vector<8x8xf32>
    %250 = arith.mulf %225, %249 : vector<8x8xf32>
    %251 = vector.broadcast %248 : vector<8x1xf32> to vector<8x8xf32>
    %252 = arith.addf %250, %251 : vector<8x8xf32>
    %cst_91 = arith.constant dense<0xFF800000> : vector<8xf32>
    %253 = vector.multi_reduction <maximumf>, %252, %cst_91 [1] : vector<8x8xf32> to vector<8xf32>
    %254 = vector.shape_cast %253 : vector<8xf32> to vector<8x1xf32>
    %255 = vector.broadcast %254 : vector<8x1xf32> to vector<8x8xf32>
    %256 = arith.subf %252, %255 : vector<8x8xf32>
    %257 = math.exp %256 : vector<8x8xf32>
    %cst_92 = arith.constant dense<0.000000e+00> : vector<8xf32>
    %258 = vector.multi_reduction <add>, %257, %cst_92 [1] : vector<8x8xf32> to vector<8xf32>
    %259 = vector.shape_cast %258 : vector<8xf32> to vector<8x1xf32>
    %260 = tpu.reciprocal %259 {approx = true} : vector<8x1xf32> -> vector<8x1xf32>
    %261 = vector.broadcast %260 : vector<8x1xf32> to vector<8x8xf32>
    %262 = arith.mulf %257, %261 : vector<8x8xf32>
    %cst_93 = arith.constant dense<0.000000e+00> : vector<8x8xf32>
    %263 = tpu.matmul %262, %224, %cst_93 {dimension_numbers = #tpu.dot_dimension_numbers<[1], [0], [0], [1], [0, 0, 1, 1], [], []>} : vector<8x8xf32>, vector<8x8xf32>, vector<8x8xf32> -> vector<8x8xf32>
    %c0_94 = arith.constant 0 : index
    %c40 = arith.constant 40 : index
    %264 = vector.load %arg11[%c0_94, %c40] : memref<8x64xf32, #tpu.memory_space<vmem>>, vector<8x8xf32>
    tpu.vector_store %arg11[%c0_94, %c40], %263 {strides = array<i32>} : memref<8x64xf32, #tpu.memory_space<vmem>>, vector<8x8xf32>,
    %265 = vector.extract_strided_slice %1 {offsets = [0, 48], sizes = [8, 8], strides = [1, 1]} : vector<8x64xf32> to vector<8x8xf32>
    %266 = vector.extract_strided_slice %3 {offsets = [0, 48], sizes = [8, 8], strides = [1, 1]} : vector<8x128xf32> to vector<8x8xf32>
    %267 = vector.extract_strided_slice %3 {offsets = [0, 112], sizes = [8, 8], strides = [1, 1]} : vector<8x128xf32> to vector<8x8xf32>
    %cst_95 = arith.constant dense<0.000000e+00> : vector<8x8xf32>
    %268 = tpu.matmul %265, %266, %cst_95 {dimension_numbers = #tpu.dot_dimension_numbers<[1], [1], [0], [0], [0, 0, 1, 0], [], []>} : vector<8x8xf32>, vector<8x8xf32>, vector<8x8xf32> -> vector<8x8xf32>
    %cst_96 = arith.constant dense<0.000000e+00> : vector<8xf32>
    %269 = vector.multi_reduction <add>, %268, %cst_96 [1] : vector<8x8xf32> to vector<8xf32>
    %270 = vector.shape_cast %269 : vector<8xf32> to vector<8x1xf32>
    %271 = arith.mulf %268, %268 : vector<8x8xf32>
    %cst_97 = arith.constant dense<0.000000e+00> : vector<8xf32>
    %272 = vector.multi_reduction <add>, %271, %cst_97 [1] : vector<8x8xf32> to vector<8xf32>
    %273 = vector.shape_cast %272 : vector<8xf32> to vector<8x1xf32>
    %cst_98 = arith.constant 1.250000e-01 : f32
    %274 = vector.broadcast %cst_98 : f32 to vector<8x1xf32>
    %275 = arith.mulf %270, %274 : vector<8x1xf32>
    %276 = arith.mulf %275, %270 : vector<8x1xf32>
    %277 = arith.subf %273, %276 : vector<8x1xf32>
    %cst_99 = arith.constant 0.142857149 : f32
    %278 = vector.broadcast %cst_99 : f32 to vector<8x1xf32>
    %279 = arith.mulf %277, %278 : vector<8x1xf32>
    %cst_100 = arith.constant 0.000000e+00 : f32
    %280 = vector.broadcast %cst_100 : f32 to vector<8x1xf32>
    %281 = arith.maximumf %279, %280 : vector<8x1xf32>
    %c6 = arith.constant 6 : index
    %c0_101 = arith.constant 0 : index
    %282 = memref.load %arg6[%c6, %c0_101] : memref<8x1xf32, #tpu.memory_space<smem>>
    %cst_102 = arith.constant 9.99999993E-9 : f32
    %283 = vector.broadcast %cst_102 : f32 to vector<8x1xf32>
    %284 = arith.addf %281, %283 : vector<8x1xf32>
    %285 = math.rsqrt %284 : vector<8x1xf32>
    %286 = vector.broadcast %282 : f32 to vector<8x1xf32>
    %287 = arith.mulf %286, %285 : vector<8x1xf32>
    %c6_103 = arith.constant 6 : index
    %c0_104 = arith.constant 0 : index
    %288 = memref.load %arg7[%c6_103, %c0_104] : memref<8x1xf32, #tpu.memory_space<smem>>
    %289 = arith.mulf %287, %275 : vector<8x1xf32>
    %290 = vector.broadcast %288 : f32 to vector<8x1xf32>
    %291 = arith.subf %290, %289 : vector<8x1xf32>
    %292 = vector.broadcast %287 : vector<8x1xf32> to vector<8x8xf32>
    %293 = arith.mulf %268, %292 : vector<8x8xf32>
    %294 = vector.broadcast %291 : vector<8x1xf32> to vector<8x8xf32>
    %295 = arith.addf %293, %294 : vector<8x8xf32>
    %cst_105 = arith.constant dense<0xFF800000> : vector<8xf32>
    %296 = vector.multi_reduction <maximumf>, %295, %cst_105 [1] : vector<8x8xf32> to vector<8xf32>
    %297 = vector.shape_cast %296 : vector<8xf32> to vector<8x1xf32>
    %298 = vector.broadcast %297 : vector<8x1xf32> to vector<8x8xf32>
    %299 = arith.subf %295, %298 : vector<8x8xf32>
    %300 = math.exp %299 : vector<8x8xf32>
    %cst_106 = arith.constant dense<0.000000e+00> : vector<8xf32>
    %301 = vector.multi_reduction <add>, %300, %cst_106 [1] : vector<8x8xf32> to vector<8xf32>
    %302 = vector.shape_cast %301 : vector<8xf32> to vector<8x1xf32>
    %303 = tpu.reciprocal %302 {approx = true} : vector<8x1xf32> -> vector<8x1xf32>
    %304 = vector.broadcast %303 : vector<8x1xf32> to vector<8x8xf32>
    %305 = arith.mulf %300, %304 : vector<8x8xf32>
    %cst_107 = arith.constant dense<0.000000e+00> : vector<8x8xf32>
    %306 = tpu.matmul %305, %267, %cst_107 {dimension_numbers = #tpu.dot_dimension_numbers<[1], [0], [0], [1], [0, 0, 1, 1], [], []>} : vector<8x8xf32>, vector<8x8xf32>, vector<8x8xf32> -> vector<8x8xf32>
    %c0_108 = arith.constant 0 : index
    %c48 = arith.constant 48 : index
    %307 = vector.load %arg11[%c0_108, %c48] : memref<8x64xf32, #tpu.memory_space<vmem>>, vector<8x8xf32>
    tpu.vector_store %arg11[%c0_108, %c48], %306 {strides = array<i32>} : memref<8x64xf32, #tpu.memory_space<vmem>>, vector<8x8xf32>,
    %308 = vector.extract_strided_slice %1 {offsets = [0, 56], sizes = [8, 8], strides = [1, 1]} : vector<8x64xf32> to vector<8x8xf32>
    %309 = vector.extract_strided_slice %3 {offsets = [0, 56], sizes = [8, 8], strides = [1, 1]} : vector<8x128xf32> to vector<8x8xf32>
    %310 = vector.extract_strided_slice %3 {offsets = [0, 120], sizes = [8, 8], strides = [1, 1]} : vector<8x128xf32> to vector<8x8xf32>
    %cst_109 = arith.constant dense<0.000000e+00> : vector<8x8xf32>
    %311 = tpu.matmul %308, %309, %cst_109 {dimension_numbers = #tpu.dot_dimension_numbers<[1], [1], [0], [0], [0, 0, 1, 0], [], []>} : vector<8x8xf32>, vector<8x8xf32>, vector<8x8xf32> -> vector<8x8xf32>
    %cst_110 = arith.constant dense<0.000000e+00> : vector<8xf32>
    %312 = vector.multi_reduction <add>, %311, %cst_110 [1] : vector<8x8xf32> to vector<8xf32>
    %313 = vector.shape_cast %312 : vector<8xf32> to vector<8x1xf32>
    %314 = arith.mulf %311, %311 : vector<8x8xf32>
    %cst_111 = arith.constant dense<0.000000e+00> : vector<8xf32>
    %315 = vector.multi_reduction <add>, %314, %cst_111 [1] : vector<8x8xf32> to vector<8xf32>
    %316 = vector.shape_cast %315 : vector<8xf32> to vector<8x1xf32>
    %cst_112 = arith.constant 1.250000e-01 : f32
    %317 = vector.broadcast %cst_112 : f32 to vector<8x1xf32>
    %318 = arith.mulf %313, %317 : vector<8x1xf32>
    %319 = arith.mulf %318, %313 : vector<8x1xf32>
    %320 = arith.subf %316, %319 : vector<8x1xf32>
    %cst_113 = arith.constant 0.142857149 : f32
    %321 = vector.broadcast %cst_113 : f32 to vector<8x1xf32>
    %322 = arith.mulf %320, %321 : vector<8x1xf32>
    %cst_114 = arith.constant 0.000000e+00 : f32
    %323 = vector.broadcast %cst_114 : f32 to vector<8x1xf32>
    %324 = arith.maximumf %322, %323 : vector<8x1xf32>
    %c7 = arith.constant 7 : index
    %c0_115 = arith.constant 0 : index
    %325 = memref.load %arg6[%c7, %c0_115] : memref<8x1xf32, #tpu.memory_space<smem>>
    %cst_116 = arith.constant 9.99999993E-9 : f32
    %326 = vector.broadcast %cst_116 : f32 to vector<8x1xf32>
    %327 = arith.addf %324, %326 : vector<8x1xf32>
    %328 = math.rsqrt %327 : vector<8x1xf32>
    %329 = vector.broadcast %325 : f32 to vector<8x1xf32>
    %330 = arith.mulf %329, %328 : vector<8x1xf32>
    %c7_117 = arith.constant 7 : index
    %c0_118 = arith.constant 0 : index
    %331 = memref.load %arg7[%c7_117, %c0_118] : memref<8x1xf32, #tpu.memory_space<smem>>
    %332 = arith.mulf %330, %318 : vector<8x1xf32>
    %333 = vector.broadcast %331 : f32 to vector<8x1xf32>
    %334 = arith.subf %333, %332 : vector<8x1xf32>
    %335 = vector.broadcast %330 : vector<8x1xf32> to vector<8x8xf32>
    %336 = arith.mulf %311, %335 : vector<8x8xf32>
    %337 = vector.broadcast %334 : vector<8x1xf32> to vector<8x8xf32>
    %338 = arith.addf %336, %337 : vector<8x8xf32>
    %cst_119 = arith.constant dense<0xFF800000> : vector<8xf32>
    %339 = vector.multi_reduction <maximumf>, %338, %cst_119 [1] : vector<8x8xf32> to vector<8xf32>
    %340 = vector.shape_cast %339 : vector<8xf32> to vector<8x1xf32>
    %341 = vector.broadcast %340 : vector<8x1xf32> to vector<8x8xf32>
    %342 = arith.subf %338, %341 : vector<8x8xf32>
    %343 = math.exp %342 : vector<8x8xf32>
    %cst_120 = arith.constant dense<0.000000e+00> : vector<8xf32>
    %344 = vector.multi_reduction <add>, %343, %cst_120 [1] : vector<8x8xf32> to vector<8xf32>
    %345 = vector.shape_cast %344 : vector<8xf32> to vector<8x1xf32>
    %346 = tpu.reciprocal %345 {approx = true} : vector<8x1xf32> -> vector<8x1xf32>
    %347 = vector.broadcast %346 : vector<8x1xf32> to vector<8x8xf32>
    %348 = arith.mulf %343, %347 : vector<8x8xf32>
    %cst_121 = arith.constant dense<0.000000e+00> : vector<8x8xf32>
    %349 = tpu.matmul %348, %310, %cst_121 {dimension_numbers = #tpu.dot_dimension_numbers<[1], [0], [0], [1], [0, 0, 1, 1], [], []>} : vector<8x8xf32>, vector<8x8xf32>, vector<8x8xf32> -> vector<8x8xf32>
    %c0_122 = arith.constant 0 : index
    %c56 = arith.constant 56 : index
    %350 = vector.load %arg11[%c0_122, %c56] : memref<8x64xf32, #tpu.memory_space<vmem>>, vector<8x8xf32>
    tpu.vector_store %arg11[%c0_122, %c56], %349 {strides = array<i32>} : memref<8x64xf32, #tpu.memory_space<vmem>>, vector<8x8xf32>,
    %c0_123 = arith.constant 0 : index
    %c0_124 = arith.constant 0 : index
    %351 = vector.load %arg11[%c0_123, %c0_124] : memref<8x64xf32, #tpu.memory_space<vmem>>, vector<8x64xf32>
    %cst_125 = arith.constant dense<0.000000e+00> : vector<8x32xf32>
    %352 = tpu.matmul %351, %6, %cst_125 {dimension_numbers = #tpu.dot_dimension_numbers<[1], [0], [0], [1], [0, 0, 1, 1], [], []>} : vector<8x64xf32>, vector<64x32xf32>, vector<8x32xf32> -> vector<8x32xf32>
    %353 = arith.addf %352, %5 : vector<8x32xf32>
    %cst_126 = arith.constant dense<0.000000e+00> : vector<8xf32>
    %354 = vector.multi_reduction <add>, %353, %cst_126 [1] : vector<8x32xf32> to vector<8xf32>
    %355 = vector.shape_cast %354 : vector<8xf32> to vector<8x1xf32>
    %cst_127 = arith.constant 3.200000e+01 : f32
    %356 = vector.broadcast %cst_127 : f32 to vector<8x1xf32>
    %357 = arith.divf %355, %356 : vector<8x1xf32>
    %358 = vector.broadcast %357 : vector<8x1xf32> to vector<8x32xf32>
    %359 = arith.subf %353, %358 : vector<8x32xf32>
    %360 = arith.mulf %359, %359 : vector<8x32xf32>
    %cst_128 = arith.constant dense<0.000000e+00> : vector<8xf32>
    %361 = vector.multi_reduction <add>, %360, %cst_128 [1] : vector<8x32xf32> to vector<8xf32>
    %362 = vector.shape_cast %361 : vector<8xf32> to vector<8x1xf32>
    %cst_129 = arith.constant 0.0322580636 : f32
    %363 = vector.broadcast %cst_129 : f32 to vector<8x1xf32>
    %364 = arith.mulf %362, %363 : vector<8x1xf32>
    %365 = vector.broadcast %357 : vector<8x1xf32> to vector<8x32xf32>
    %366 = arith.subf %353, %365 : vector<8x32xf32>
    %cst_130 = arith.constant 9.99999993E-9 : f32
    %367 = vector.broadcast %cst_130 : f32 to vector<8x1xf32>
    %368 = arith.addf %364, %367 : vector<8x1xf32>
    %369 = math.rsqrt %368 : vector<8x1xf32>
    %370 = vector.broadcast %369 : vector<8x1xf32> to vector<8x32xf32>
    %371 = arith.mulf %366, %370 : vector<8x32xf32>
    %c0_131 = arith.constant 0 : index
    %372 = memref.load %arg8[%c0_131] : memref<1xf32, #tpu.memory_space<smem>>
    %373 = vector.broadcast %372 : f32 to vector<8x32xf32>
    %374 = arith.mulf %373, %371 : vector<8x32xf32>
    %c0_132 = arith.constant 0 : index
    %375 = memref.load %arg9[%c0_132] : memref<1xf32, #tpu.memory_space<smem>>
    %376 = vector.broadcast %375 : f32 to vector<8x32xf32>
    %377 = arith.addf %374, %376 : vector<8x32xf32>
    %c0_133 = arith.constant 0 : index
    %c0_134 = arith.constant 0 : index
    %c0_135 = arith.constant 0 : index
    %378 = vector.load %arg10[%c0_133, %c0_134, %c0_135] : memref<1x8x32xf32, #tpu.memory_space<vmem>>, vector<1x8x32xf32>
    %379 = vector.shape_cast %378 : vector<1x8x32xf32> to vector<8x32xf32>
    %380 = vector.shape_cast %377 : vector<8x32xf32> to vector<1x8x32xf32>
    tpu.vector_store %arg10[%c0_133, %c0_134, %c0_135], %380 {strides = array<i32>} : memref<1x8x32xf32, #tpu.memory_space<vmem>>, vector<1x8x32xf32>,
    return
  }
  func.func @transform_0(%arg0: i32, %arg1: i32) -> (i32, i32, i32) {
    %c0_i32 = arith.constant 0 : i32
    %c0_i32_0 = arith.constant 0 : i32
    return %arg0, %arg1, %c0_i32 : i32, i32, i32
  }
  func.func @transform_1(%arg0: i32, %arg1: i32) -> (i32, i32, i32) {
    %c0_i32 = arith.constant 0 : i32
    %c0_i32_0 = arith.constant 0 : i32
    %c0_i32_1 = arith.constant 0 : i32
    return %arg0, %c0_i32, %c0_i32_0 : i32, i32, i32
  }
  func.func @transform_2(%arg0: i32, %arg1: i32) -> (i32, i32, i32) {
    %c0_i32 = arith.constant 0 : i32
    %c0_i32_0 = arith.constant 0 : i32
    return %arg0, %arg1, %c0_i32 : i32, i32, i32
  }
  func.func @transform_3(%arg0: i32, %arg1: i32) -> (i32, i32) {
    %c0_i32 = arith.constant 0 : i32
    %c0_i32_0 = arith.constant 0 : i32
    %c0_i32_1 = arith.constant 0 : i32
    return %c0_i32, %c0_i32_0 : i32, i32
  }
  func.func @transform_4(%arg0: i32, %arg1: i32) -> (i32, i32) {
    %c0_i32 = arith.constant 0 : i32
    %c0_i32_0 = arith.constant 0 : i32
    %c0_i32_1 = arith.constant 0 : i32
    return %c0_i32, %c0_i32_0 : i32, i32
  }
  func.func @transform_5(%arg0: i32, %arg1: i32) -> (i32, i32) {
    %c0_i32 = arith.constant 0 : i32
    %c0_i32_0 = arith.constant 0 : i32
    %c0_i32_1 = arith.constant 0 : i32
    return %c0_i32, %c0_i32_0 : i32, i32
  }
  func.func @transform_6(%arg0: i32, %arg1: i32) -> i32 {
    %c0_i32 = arith.constant 0 : i32
    %c0_i32_0 = arith.constant 0 : i32
    return %c0_i32 : i32
  }
  func.func @transform_7(%arg0: i32, %arg1: i32) -> i32 {
    %c0_i32 = arith.constant 0 : i32
    %c0_i32_0 = arith.constant 0 : i32
    return %c0_i32 : i32
  }
  func.func @transform_8(%arg0: i32, %arg1: i32) -> (i32, i32, i32) {
    %c0_i32 = arith.constant 0 : i32
    %c0_i32_0 = arith.constant 0 : i32
    return %arg0, %arg1, %c0_i32 : i32, i32, i32
  }
}

</mosaic_0001>

<llo_original>
// kernel: encoder_forward.4
$region0: #{encoder_forward.4}
  #allocation0 [shape = 'u32[]', space=smem, size = 0x4, offset = 0x4, fixed_abs, tag = 'smem constant byte address 0x4 - core index']
  #allocation1 [shape = 'u32[72,128]{1,0:T(1,128)}', space=vmem, size = 0x9000, scoped, tag = 'internal scratch']
  #allocation2 [shape = 'f32[16,64]{1,0:T(8,128)}', space=vmem, size = 0x2000, scoped, tag = 'scratch operand']
  %s0 = inlined_call_operand.hbm [shape: f32[16,32], index: 0, kind: input, shape index: {}]
  %s1 = inlined_call_operand.hbm [shape: f32[32,64], index: 1, kind: input, shape index: {}]
  %s2 = inlined_call_operand.vmem [shape: f32[16,64], index: 2, kind: output, shape index: {}]
  %s3 = sld [smem:[#allocation0]]
  $region34: #{encoder_forward.4} parent=0
    _
  %s5 = ssub.s32 1, %s3
  %s6 = scalar_select 0, %s5, %s3
  $region1: #{encoder_forward.4} parent=0
    #allocation3 [shape = 'u8[8192]{0}', space=vmem, size = 0x2000, scoped, tag = 'input window, operand 0, single buffered']
    #allocation4 [shape = 's32[1]{0}', space=sflag, size = 0x4, scoped, tag = 'scoped memory for encoder_forward.4']
    #allocation5 [shape = 'u8[16384]{0}', space=vmem, size = 0x4000, scoped, tag = 'input window, operand 1, single buffered']
    #allocation6 [shape = 's32[1]{0}', space=sflag, size = 0x4, scoped, tag = 'scoped memory for encoder_forward.4']
    %7 = vsyncpa [#allocation4], 0
    %8 = vsyncpa [#allocation6], 0
    // Predicated region
    $region2: #{encoder_forward.4} parent=1 // pred_check
      _
    $region3: #{encoder_forward.4} parent=1 // pred_check_branch
      %10 = sbr.rel (0) target = $region5
    $region4: #{encoder_forward.4} parent=1 // pred_region
      %12 = vsyncadd [#allocation4], 0
      %s13 = sshll.u32 %s0, 4
      %s14 = int_to_ptr.hbm [resolvable:$true] %s13
      %s15 = sshll.u32 [#allocation3], 4
      %s16 = int_to_ptr.vmem [resolvable:$true] %s15
      %21 = dma.hbm_to_vmem [thread:$0]  %s14, 256, %s16, [#allocation4], 128, 128, 8
    $region5: #{encoder_forward.4} parent=1 // pred_fallthru
      _
    // Predicated region
    $region6: #{encoder_forward.4} parent=1 // pred_check
      _
    $region7: #{encoder_forward.4} parent=1 // pred_check_branch
      %23 = sbr.rel (0) target = $region9
    $region8: #{encoder_forward.4} parent=1 // pred_region
      %25 = vsyncadd [#allocation6], 0
      %s26 = sshll.u32 %s1, 4
      %s27 = int_to_ptr.hbm [resolvable:$true] %s26
      %s28 = sshll.u32 [#allocation5], 4
      %s29 = int_to_ptr.vmem [resolvable:$true] %s28
      %34 = dma.hbm_to_vmem [thread:$0]  %s27, 512, %s29, [#allocation6], 128, 128, 8
    $region9: #{encoder_forward.4} parent=1 // pred_fallthru
      _
    // Predicated region
    $region10: #{encoder_forward.4} parent=1 // pred_check
      _
    $region11: #{encoder_forward.4} parent=1 // pred_check_branch
      %36 = sbr.rel (0) target = $region13
    $region12: #{encoder_forward.4} parent=1 // pred_region
      %38 = dma.done [#allocation4], 256
    $region13: #{encoder_forward.4} parent=1 // pred_fallthru
      _
    // Predicated region
    $region14: #{encoder_forward.4} parent=1 // pred_check
      _
    $region15: #{encoder_forward.4} parent=1 // pred_check_branch
      %40 = sbr.rel (0) target = $region17
    $region16: #{encoder_forward.4} parent=1 // pred_region
      %42 = dma.done [#allocation6], 512
    $region17: #{encoder_forward.4} parent=1 // pred_fallthru
      _
    %p43 = scmp.eq.s32.totalorder 0, 0
    // Predicated region
    $region18: #{encoder_forward.4} parent=1 // pred_check
      %p44 = pneg %p43
    $region19: #{encoder_forward.4} parent=1 // pred_check_branch
      %46 = sbr.rel (%p44) target = $region21
    $region20: #{encoder_forward.4} parent=1 // pred_region
      %vm47 = vcmask 523264
      %48 = vst.msk [vmem:[#allocation2] sm:$0xff] %vm47, 0.0
      %49 = vst.msk [vmem:[#allocation2 + $0x8] sm:$0xff] %vm47, 0.0
    $region21: #{encoder_forward.4} parent=1 // pred_fallthru
      _
    %v50 = vld [vmem:[#allocation2] sm:$0xff]
    %v51 = vld [vmem:[#allocation2 + $0x8] sm:$0xff]
    %v52 = vld [vmem:[#allocation3] sm:$0xff]
    %v53 = vld [vmem:[#allocation3 + $0x8] sm:$0xff]
    %v54 = vld [vmem:[#allocation5] sm:$0xff]
    %v55 = vld [vmem:[#allocation5 + $0x8] sm:$0xff]
    %v56 = vld [vmem:[#allocation5 + $0x10] sm:$0xff]
    %v57 = vld [vmem:[#allocation5 + $0x18] sm:$0xff]
    %vm58 = vcmask 261120
    %v60 = vsel %vm58, %v52, 0
    %v63 = vsel %vm58, %v53, 0
    %65 = vmatpush.msra.mxu0 0.0
    %66 = vmatpush.msra.mxu0 0.0
    %67 = vmatpush.msra.mxu0 0.0
    %68 = vmatpush.msra.mxu0 0.0
    %69 = vmatpush.msra.mxu0 0.0
    %70 = vmatpush.msra.mxu0 0.0
    %71 = vmatpush.msra.mxu0 0.0
    %72 = vmatpush.msra.mxu0 0.0
    %73 = vmatpush.msra.mxu0 0.0
    %74 = vmatpush.msra.mxu0 0.0
    %75 = vmatpush.msra.mxu0 0.0
    %76 = vmatpush.msra.mxu0 0.0
    %77 = vmatpush.msra.mxu0 %v57
    %78 = vmatpush.msra.mxu0 %v56
    %79 = vmatpush.msra.mxu0 %v55
    %80 = vmatpush.msra.mxu0 %v54
    %81 = vmatmul.f32.gmra.mxu0 %v60
    %v82 = vpop.f32.mrf.mxu0
    %v83 = vadd.f32 0.0, %v82
    %84 = vmatmul.f32.gmra.mxu0 %v63
    %v85 = vpop.f32.mrf.mxu0
    %v86 = vadd.f32 0.0, %v85
    %87 = vdwg.mxu0
    %v88 = vadd.f32 %v50, %v83
    %v89 = vadd.f32 %v51, %v86
    %vm90 = vcmask 523264
    %91 = vst.msk [vmem:[#allocation2] sm:$0xff] %vm90, %v88
    %92 = vst.msk [vmem:[#allocation2 + $0x8] sm:$0xff] %vm90, %v89
    // Predicated region
    $region22: #{encoder_forward.4} parent=1 // pred_check
      %p93 = pneg %p43
    $region23: #{encoder_forward.4} parent=1 // pred_check_branch
      %95 = sbr.rel (%p93) target = $region25
    $region24: #{encoder_forward.4} parent=1 // pred_region
      %v96 = vld [vmem:[#allocation2] sm:$0xff]
      %v97 = vld [vmem:[#allocation2 + $0x8] sm:$0xff]
      %98 = vst.msk [vmem:[%s2] sm:$0xff] %vm90, %v96
      %99 = vst.msk [vmem:[%s2 + $0x8] sm:$0xff] %vm90, %v97
    $region25: #{encoder_forward.4} parent=1 // pred_fallthru
      _
    // Predicated region
    $region26: #{encoder_forward.4} parent=1 // pred_check
      _
    $region27: #{encoder_forward.4} parent=1 // pred_check_branch
      %101 = sbr.rel (0) target = $region29
    $region28: #{encoder_forward.4} parent=1 // pred_region
      _
    $region29: #{encoder_forward.4} parent=1 // pred_fallthru
      _
    // Predicated region
    $region30: #{encoder_forward.4} parent=1 // pred_check
      _
    $region31: #{encoder_forward.4} parent=1 // pred_check_branch
      %103 = sbr.rel (0) target = $region33
    $region32: #{encoder_forward.4} parent=1 // pred_region
      _
    $region33: #{encoder_forward.4} parent=1 // pred_fallthru
      _
    %104 = vsyncpa [#allocation4], 1
    %105 = vsyncpa [#allocation6], 1

// kernel: encoder_forward.5
$region0: #{encoder_forward.5}
  #allocation0 [shape = 'u32[]', space=smem, size = 0x4, offset = 0x4, fixed_abs, tag = 'smem constant byte address 0x4 - core index']
  #allocation1 [shape = 'u32[72,128]{1,0:T(1,128)}', space=vmem, size = 0x9000, scoped, tag = 'internal scratch']
  #allocation2 [shape = 'f32[16,128]{1,0:T(8,128)}', space=vmem, size = 0x2000, scoped, tag = 'scratch operand']
  %s0 = inlined_call_operand.hbm [shape: f32[16,32], index: 0, kind: input, shape index: {}]
  %s1 = inlined_call_operand.hbm [shape: f32[32,128], index: 1, kind: input, shape index: {}]
  %s2 = inlined_call_operand.vmem [shape: f32[16,128], index: 2, kind: output, shape index: {}]
  %s3 = sld [smem:[#allocation0]]
  $region34: #{encoder_forward.5} parent=0
    _
  %s5 = ssub.s32 1, %s3
  %s6 = scalar_select 0, %s5, %s3
  $region1: #{encoder_forward.5} parent=0
    #allocation3 [shape = 'u8[8192]{0}', space=vmem, size = 0x2000, scoped, tag = 'input window, operand 0, single buffered']
    #allocation4 [shape = 's32[1]{0}', space=sflag, size = 0x4, scoped, tag = 'scoped memory for encoder_forward.5']
    #allocation5 [shape = 'u8[16384]{0}', space=vmem, size = 0x4000, scoped, tag = 'input window, operand 1, single buffered']
    #allocation6 [shape = 's32[1]{0}', space=sflag, size = 0x4, scoped, tag = 'scoped memory for encoder_forward.5']
    %7 = vsyncpa [#allocation4], 0
    %8 = vsyncpa [#allocation6], 0
    // Predicated region
    $region2: #{encoder_forward.5} parent=1 // pred_check
      _
    $region3: #{encoder_forward.5} parent=1 // pred_check_branch
      %10 = sbr.rel (0) target = $region5
    $region4: #{encoder_forward.5} parent=1 // pred_region
      %12 = vsyncadd [#allocation4], 0
      %s13 = sshll.u32 %s0, 4
      %s14 = int_to_ptr.hbm [resolvable:$true] %s13
      %s15 = sshll.u32 [#allocation3], 4
      %s16 = int_to_ptr.vmem [resolvable:$true] %s15
      %21 = dma.hbm_to_vmem [thread:$0]  %s14, 256, %s16, [#allocation4], 128, 128, 8
    $region5: #{encoder_forward.5} parent=1 // pred_fallthru
      _
    // Predicated region
    $region6: #{encoder_forward.5} parent=1 // pred_check
      _
    $region7: #{encoder_forward.5} parent=1 // pred_check_branch
      %23 = sbr.rel (0) target = $region9
    $region8: #{encoder_forward.5} parent=1 // pred_region
      %25 = vsyncadd [#allocation6], 0
      %s26 = sshll.u32 %s1, 4
      %s27 = int_to_ptr.hbm [resolvable:$true] %s26
      %s28 = sshll.u32 [#allocation5], 4
      %s29 = int_to_ptr.vmem [resolvable:$true] %s28
      %34 = dma.hbm_to_vmem [thread:$0]  %s27, 512, %s29, [#allocation6], 128, 128, 8
    $region9: #{encoder_forward.5} parent=1 // pred_fallthru
      _
    // Predicated region
    $region10: #{encoder_forward.5} parent=1 // pred_check
      _
    $region11: #{encoder_forward.5} parent=1 // pred_check_branch
      %36 = sbr.rel (0) target = $region13
    $region12: #{encoder_forward.5} parent=1 // pred_region
      %38 = dma.done [#allocation4], 256
    $region13: #{encoder_forward.5} parent=1 // pred_fallthru
      _
    // Predicated region
    $region14: #{encoder_forward.5} parent=1 // pred_check
      _
    $region15: #{encoder_forward.5} parent=1 // pred_check_branch
      %40 = sbr.rel (0) target = $region17
    $region16: #{encoder_forward.5} parent=1 // pred_region
      %42 = dma.done [#allocation6], 512
    $region17: #{encoder_forward.5} parent=1 // pred_fallthru
      _
    %p43 = scmp.eq.s32.totalorder 0, 0
    // Predicated region
    $region18: #{encoder_forward.5} parent=1 // pred_check
      %p44 = pneg %p43
    $region19: #{encoder_forward.5} parent=1 // pred_check_branch
      %46 = sbr.rel (%p44) target = $region21
    $region20: #{encoder_forward.5} parent=1 // pred_region
      %47 = vst [vmem:[#allocation2] sm:$0xff] 0.0
      %48 = vst [vmem:[#allocation2 + $0x8] sm:$0xff] 0.0
    $region21: #{encoder_forward.5} parent=1 // pred_fallthru
      _
    %v49 = vld [vmem:[#allocation2] sm:$0xff]
    %v50 = vld [vmem:[#allocation2 + $0x8] sm:$0xff]
    %v51 = vld [vmem:[#allocation3] sm:$0xff]
    %v52 = vld [vmem:[#allocation3 + $0x8] sm:$0xff]
    %v53 = vld [vmem:[#allocation5] sm:$0xff]
    %v54 = vld [vmem:[#allocation5 + $0x8] sm:$0xff]
    %v55 = vld [vmem:[#allocation5 + $0x10] sm:$0xff]
    %v56 = vld [vmem:[#allocation5 + $0x18] sm:$0xff]
    %vm57 = vcmask 261120
    %v59 = vsel %vm57, %v51, 0
    %v62 = vsel %vm57, %v52, 0
    %64 = vmatpush.msra.mxu0 0.0
    %65 = vmatpush.msra.mxu0 0.0
    %66 = vmatpush.msra.mxu0 0.0
    %67 = vmatpush.msra.mxu0 0.0
    %68 = vmatpush.msra.mxu0 0.0
    %69 = vmatpush.msra.mxu0 0.0
    %70 = vmatpush.msra.mxu0 0.0
    %71 = vmatpush.msra.mxu0 0.0
    %72 = vmatpush.msra.mxu0 0.0
    %73 = vmatpush.msra.mxu0 0.0
    %74 = vmatpush.msra.mxu0 0.0
    %75 = vmatpush.msra.mxu0 0.0
    %76 = vmatpush.msra.mxu0 %v56
    %77 = vmatpush.msra.mxu0 %v55
    %78 = vmatpush.msra.mxu0 %v54
    %79 = vmatpush.msra.mxu0 %v53
    %80 = vmatmul.f32.gmra.mxu0 %v59
    %v81 = vpop.f32.mrf.mxu0
    %v82 = vadd.f32 0.0, %v81
    %83 = vmatmul.f32.gmra.mxu0 %v62
    %v84 = vpop.f32.mrf.mxu0
    %v85 = vadd.f32 0.0, %v84
    %86 = vdwg.mxu0
    %v87 = vadd.f32 %v49, %v82
    %v88 = vadd.f32 %v50, %v85
    %89 = vst [vmem:[#allocation2] sm:$0xff] %v87
    %90 = vst [vmem:[#allocation2 + $0x8] sm:$0xff] %v88
    // Predicated region
    $region22: #{encoder_forward.5} parent=1 // pred_check
      %p91 = pneg %p43
    $region23: #{encoder_forward.5} parent=1 // pred_check_branch
      %93 = sbr.rel (%p91) target = $region25
    $region24: #{encoder_forward.5} parent=1 // pred_region
      %v94 = vld [vmem:[#allocation2] sm:$0xff]
      %v95 = vld [vmem:[#allocation2 + $0x8] sm:$0xff]
      %96 = vst [vmem:[%s2] sm:$0xff] %v94
      %97 = vst [vmem:[%s2 + $0x8] sm:$0xff] %v95
    $region25: #{encoder_forward.5} parent=1 // pred_fallthru
      _
    // Predicated region
    $region26: #{encoder_forward.5} parent=1 // pred_check
      _
    $region27: #{encoder_forward.5} parent=1 // pred_check_branch
      %99 = sbr.rel (0) target = $region29
    $region28: #{encoder_forward.5} parent=1 // pred_region
      _
    $region29: #{encoder_forward.5} parent=1 // pred_fallthru
      _
    // Predicated region
    $region30: #{encoder_forward.5} parent=1 // pred_check
      _
    $region31: #{encoder_forward.5} parent=1 // pred_check_branch
      %101 = sbr.rel (0) target = $region33
    $region32: #{encoder_forward.5} parent=1 // pred_region
      _
    $region33: #{encoder_forward.5} parent=1 // pred_fallthru
      _
    %102 = vsyncpa [#allocation4], 1
    %103 = vsyncpa [#allocation6], 1

// kernel: encoder_forward.7
$region0: #{encoder_forward.7}
  #allocation0 [shape = 'u32[]', space=smem, size = 0x4, offset = 0x4, fixed_abs, tag = 'smem constant byte address 0x4 - core index']
  #allocation1 [shape = 'u32[72,128]{1,0:T(1,128)}', space=vmem, size = 0x9000, scoped, tag = 'internal scratch']
  #allocation2 [shape = 'f32[1]{0:T(128)S(6)}', space=smem, size = 0x200, scoped, tag = 'scoped memory for encoder_forward.7']
  #allocation3 [shape = 'f32[1]{0:T(128)S(6)}', space=smem, size = 0x200, scoped, tag = 'scoped memory for encoder_forward.7']
  %s0 = inlined_call_operand.vmem [shape: f32[16,32], index: 0, kind: input, shape index: {}]
  %s1 = inlined_call_operand.vmem [shape: f32[32,128], index: 1, kind: input, shape index: {}]
  %s2 = inlined_call_operand.vmem [shape: f32[1,128], index: 2, kind: input, shape index: {}]
  %s3 = inlined_call_operand.vmem [shape: f32[128,32], index: 3, kind: input, shape index: {}]
  %s4 = inlined_call_operand.vmem [shape: f32[1,32], index: 4, kind: input, shape index: {}]
  %s5 = inlined_call_operand.<no memory space> [shape: f32[1], index: 5, kind: input, shape index: {}]
  %s6 = inlined_call_operand.<no memory space> [shape: f32[1], index: 6, kind: input, shape index: {}]
  %s7 = inlined_call_operand.hbm [shape: f32[16,32], index: 7, kind: output, shape index: {}]
  %s8 = sld [smem:[#allocation0]]
  $region38: #{encoder_forward.7} parent=0
    _
  %s10 = ssub.s32 1, %s8
  %s11 = scalar_select 0, %s10, %s8
  %12 = sst [smem:[#allocation2]] %s5
  %13 = sst [smem:[#allocation3]] %s6
  $region1: #{encoder_forward.7} parent=0
    #allocation4 [shape = 'u8[8192]{0}', space=vmem, size = 0x2000, scoped, tag = 'output window, operand 0, single buffered']
    #allocation5 [shape = 's32[1]{0}', space=sflag, size = 0x4, scoped, tag = 'scoped memory for encoder_forward.7']
    %14 = vsyncpa [#allocation5], 0
    // Predicated region
    $region2: #{encoder_forward.7} parent=1 // pred_check
      _
    $region3: #{encoder_forward.7} parent=1 // pred_check_branch
      %16 = sbr.rel (0) target = $region5
    $region4: #{encoder_forward.7} parent=1 // pred_region
      _
    $region5: #{encoder_forward.7} parent=1 // pred_fallthru
      _
    // Predicated region
    $region6: #{encoder_forward.7} parent=1 // pred_check
      _
    $region7: #{encoder_forward.7} parent=1 // pred_check_branch
      %18 = sbr.rel (0) target = $region9
    $region8: #{encoder_forward.7} parent=1 // pred_region
      _
    $region9: #{encoder_forward.7} parent=1 // pred_fallthru
      _
    // Predicated region
    $region10: #{encoder_forward.7} parent=1 // pred_check
      _
    $region11: #{encoder_forward.7} parent=1 // pred_check_branch
      %20 = sbr.rel (0) target = $region13
    $region12: #{encoder_forward.7} parent=1 // pred_region
      _
    $region13: #{encoder_forward.7} parent=1 // pred_fallthru
      _
    // Predicated region
    $region14: #{encoder_forward.7} parent=1 // pred_check
      _
    $region15: #{encoder_forward.7} parent=1 // pred_check_branch
      %22 = sbr.rel (0) target = $region17
    $region16: #{encoder_forward.7} parent=1 // pred_region
      _
    $region17: #{encoder_forward.7} parent=1 // pred_fallthru
      _
    // Predicated region
    $region18: #{encoder_forward.7} parent=1 // pred_check
      _
    $region19: #{encoder_forward.7} parent=1 // pred_check_branch
      %24 = sbr.rel (0) target = $region21
    $region20: #{encoder_forward.7} parent=1 // pred_region
      _
    $region21: #{encoder_forward.7} parent=1 // pred_fallthru
      _
    // Predicated region
    $region22: #{encoder_forward.7} parent=1 // pred_check
      _
    $region23: #{encoder_forward.7} parent=1 // pred_check_branch
      %26 = sbr.rel (0) target = $region25
    $region24: #{encoder_forward.7} parent=1 // pred_region
      _
    $region25: #{encoder_forward.7} parent=1 // pred_fallthru
      _
    // Predicated region
    $region26: #{encoder_forward.7} parent=1 // pred_check
      _
    $region27: #{encoder_forward.7} parent=1 // pred_check_branch
      %28 = sbr.rel (0) target = $region29
    $region28: #{encoder_forward.7} parent=1 // pred_region
      _
    $region29: #{encoder_forward.7} parent=1 // pred_fallthru
      _
    %v29 = vld [vmem:[%s0] sm:$0xff]
    %v30 = vld [vmem:[%s0 + $0x8] sm:$0xff]
    %v31 = vld [vmem:[%s1] sm:$0xff]
    %v32 = vld [vmem:[%s1 + $0x8] sm:$0xff]
    %v33 = vld [vmem:[%s1 + $0x10] sm:$0xff]
    %v34 = vld [vmem:[%s1 + $0x18] sm:$0xff]
    %v35 = vld [vmem:[%s2] sm:$0x1]
    %v37 = vperm.slane %v35, 0
    %vm39 = vcmask 261120
    %v41 = vsel %vm39, %v29, 0
    %v44 = vsel %vm39, %v30, 0
    %46 = vmatpush.msra.mxu0 0.0
    %47 = vmatpush.msra.mxu0 0.0
    %48 = vmatpush.msra.mxu0 0.0
    %49 = vmatpush.msra.mxu0 0.0
    %50 = vmatpush.msra.mxu0 0.0
    %51 = vmatpush.msra.mxu0 0.0
    %52 = vmatpush.msra.mxu0 0.0
    %53 = vmatpush.msra.mxu0 0.0
    %54 = vmatpush.msra.mxu0 0.0
    %55 = vmatpush.msra.mxu0 0.0
    %56 = vmatpush.msra.mxu0 0.0
    %57 = vmatpush.msra.mxu0 0.0
    %58 = vmatpush.msra.mxu0 %v34
    %59 = vmatpush.msra.mxu0 %v33
    %60 = vmatpush.msra.mxu0 %v32
    %61 = vmatpush.msra.mxu0 %v31
    %62 = vmatmul.f32.gmra.mxu0 %v41
    %v63 = vpop.f32.mrf.mxu0
    %v64 = vadd.f32 %v37, %v63
    %65 = vmatmul.f32.gmra.mxu0 %v44
    %v66 = vpop.f32.mrf.mxu0
    %v67 = vadd.f32 %v37, %v66
    %68 = vdwg.mxu0
    %v69 = vmax.f32 %v64, 0.0
    %v70 = vmax.f32 %v67, 0.0
    %v71 = vld [vmem:[%s3] sm:$0xff]
    %v72 = vld [vmem:[%s3 + $0x8] sm:$0xff]
    %v73 = vld [vmem:[%s3 + $0x10] sm:$0xff]
    %v74 = vld [vmem:[%s3 + $0x18] sm:$0xff]
    %v75 = vld [vmem:[%s3 + $0x20] sm:$0xff]
    %v76 = vld [vmem:[%s3 + $0x28] sm:$0xff]
    %v77 = vld [vmem:[%s3 + $0x30] sm:$0xff]
    %v78 = vld [vmem:[%s3 + $0x38] sm:$0xff]
    %v79 = vld [vmem:[%s3 + $0x40] sm:$0xff]
    %v80 = vld [vmem:[%s3 + $0x48] sm:$0xff]
    %v81 = vld [vmem:[%s3 + $0x50] sm:$0xff]
    %v82 = vld [vmem:[%s3 + $0x58] sm:$0xff]
    %v83 = vld [vmem:[%s3 + $0x60] sm:$0xff]
    %v84 = vld [vmem:[%s3 + $0x68] sm:$0xff]
    %v85 = vld [vmem:[%s3 + $0x70] sm:$0xff]
    %v86 = vld [vmem:[%s3 + $0x78] sm:$0xff]
    %v87 = vld [vmem:[%s4] sm:$0x1]
    %v89 = vperm.slane %v87, 0
    %91 = vmatpush.msra.mxu0 %v86
    %92 = vmatpush.msra.mxu0 %v85
    %93 = vmatpush.msra.mxu0 %v84
    %94 = vmatpush.msra.mxu0 %v83
    %95 = vmatpush.msra.mxu0 %v82
    %96 = vmatpush.msra.mxu0 %v81
    %97 = vmatpush.msra.mxu0 %v80
    %98 = vmatpush.msra.mxu0 %v79
    %99 = vmatpush.msra.mxu0 %v78
    %100 = vmatpush.msra.mxu0 %v77
    %101 = vmatpush.msra.mxu0 %v76
    %102 = vmatpush.msra.mxu0 %v75
    %103 = vmatpush.msra.mxu0 %v74
    %104 = vmatpush.msra.mxu0 %v73
    %105 = vmatpush.msra.mxu0 %v72
    %106 = vmatpush.msra.mxu0 %v71
    %107 = vmatmul.f32.gmra.mxu0 %v69
    %v108 = vpop.f32.mrf.mxu0
    %v109 = vadd.f32 %v89, %v108
    %110 = vmatmul.f32.gmra.mxu0 %v70
    %v111 = vpop.f32.mrf.mxu0
    %v112 = vadd.f32 %v89, %v111
    %113 = vdwg.mxu0
    %v114 = vadd.f32 %v109, %v29
    %v115 = vadd.f32 %v112, %v30
    %v116 = vsel %vm39, %v114, 0.0
    %117 = vadd.xlane.f32.xlu0 %v116
    %v118 = vpop.xlane.xlu0 %117
    %v119 = vsel %vm39, %v115, 0.0
    %120 = vadd.xlane.f32.xlu0 %v119
    %v121 = vpop.xlane.xlu0 %120
    %v122 = vrcp.pop 32.0
    %v123 = vmul.f32 32.0, %v122
    %v124 = vsub.f32 1.0, %v123
    %v125 = vmul.f32 %v122, %v124
    %v126 = vadd.f32 %v122, %v125
    %vm127 = vweird.f32 %v122
    %v128 = vsel %vm127, %v122, %v126
    %v129 = vmul.f32 %v118, %v128
    %v130 = vmul.f32 %v121, %v128
    %v131 = vsub.f32 %v114, %v129
    %v132 = vsub.f32 %v115, %v130
    %v133 = vmul.f32 %v131, %v131
    %v134 = vmul.f32 %v132, %v132
    %v135 = vsel %vm39, %v133, 0.0
    %136 = vadd.xlane.f32.xlu0 %v135
    %v137 = vpop.xlane.xlu0 %136
    %v138 = vsel %vm39, %v134, 0.0
    %139 = vadd.xlane.f32.xlu0 %v138
    %v140 = vpop.xlane.xlu0 %139
    %v141 = vmul.f32 %v137, 0.032258064
    %v142 = vmul.f32 %v140, 0.032258064
    %v143 = vadd.f32 %v141, 1e-08
    %v144 = vadd.f32 %v142, 1e-08
    %v145 = vrsqrt.pop %v143
    %v146 = vmul.f32 %v145, %v143
    %v147 = vmul.f32 %v146, %v145
    %v148 = vmul.f32 0.5, %v147
    %v149 = vsub.f32 1.5, %v148
    %v150 = vmul.f32 %v145, %v149
    %vm151 = vweird.f32 %v143
    %vm152 = vweird.f32 %v145
    %vm153 = vmor %vm151, %vm152
    %v154 = vsel %vm153, %v145, %v150
    %v155 = vrsqrt.pop %v144
    %v156 = vmul.f32 %v155, %v144
    %v157 = vmul.f32 %v156, %v155
    %v158 = vmul.f32 0.5, %v157
    %v159 = vsub.f32 1.5, %v158
    %v160 = vmul.f32 %v155, %v159
    %vm161 = vweird.f32 %v144
    %vm162 = vweird.f32 %v155
    %vm163 = vmor %vm161, %vm162
    %v164 = vsel %vm163, %v155, %v160
    %v165 = vmul.f32 %v131, %v154
    %v166 = vmul.f32 %v132, %v164
    %s167 = sld [smem:[#allocation2]]
    %v168 = vstv %s167
    %v169 = vmul.f32 %v168, %v165
    %v170 = vmul.f32 %v168, %v166
    %s171 = sld [smem:[#allocation3]]
    %v172 = vstv %s171
    %v173 = vadd.f32 %v169, %v172
    %v174 = vadd.f32 %v170, %v172
    %175 = vst.msk [vmem:[#allocation4] sm:$0xff] %vm39, %v173
    %176 = vst.msk [vmem:[#allocation4 + $0x8] sm:$0xff] %vm39, %v174
    // Predicated region
    $region30: #{encoder_forward.7} parent=1 // pred_check
      _
    $region31: #{encoder_forward.7} parent=1 // pred_check_branch
      %178 = sbr.rel (0) target = $region33
    $region32: #{encoder_forward.7} parent=1 // pred_region
      %180 = vsyncadd [#allocation5], 0
      %s181 = sshll.u32 [#allocation4], 4
      %s182 = int_to_ptr.vmem [resolvable:$true] %s181
      %s183 = sshll.u32 %s7, 4
      %s184 = int_to_ptr.hbm [resolvable:$true] %s183
      %189 = dma.vmem_to_hbm [thread:$0]  %s182, 256, %s184, [#allocation5], 128, 128, 8
    $region33: #{encoder_forward.7} parent=1 // pred_fallthru
      _
    // Predicated region
    $region34: #{encoder_forward.7} parent=1 // pred_check
      _
    $region35: #{encoder_forward.7} parent=1 // pred_check_branch
      %191 = sbr.rel (0) target = $region37
    $region36: #{encoder_forward.7} parent=1 // pred_region
      %193 = dma.done [#allocation5], 256
    $region37: #{encoder_forward.7} parent=1 // pred_fallthru
      _
    %194 = vsyncpa [#allocation5], 1

// kernel: encoder_forward.6
$region0: #{encoder_forward.6}
  #allocation0 [shape = 'u32[]', space=smem, size = 0x4, offset = 0x4, fixed_abs, tag = 'smem constant byte address 0x4 - core index']
  #allocation1 [shape = 'u32[72,128]{1,0:T(1,128)}', space=vmem, size = 0x9000, scoped, tag = 'internal scratch']
  #allocation2 [shape = 'f32[8,64]{1,0:T(8,128)}', space=vmem, size = 0x1000, scoped, tag = 'scratch operand']
  #allocation3 [shape = 'f32[1]{0:T(128)S(6)}', space=smem, size = 0x200, scoped, tag = 'scoped memory for encoder_forward.6']
  #allocation4 [shape = 'f32[1]{0:T(128)S(6)}', space=smem, size = 0x200, scoped, tag = 'scoped memory for encoder_forward.6']
  %s0 = inlined_call_operand.vmem [shape: f32[2,8,64], index: 0, kind: input, shape index: {}]
  %s1 = inlined_call_operand.vmem [shape: f32[2,8,128], index: 1, kind: input, shape index: {}]
  %s2 = inlined_call_operand.vmem [shape: f32[2,8,32], index: 2, kind: input, shape index: {}]
  %s3 = inlined_call_operand.vmem [shape: f32[64,32], index: 3, kind: input, shape index: {}]
  %s4 = inlined_call_operand.vmem [shape: f32[8,1], index: 4, kind: input, shape index: {}]
  %s5 = inlined_call_operand.vmem [shape: f32[8,1], index: 5, kind: input, shape index: {}]
  %s6 = inlined_call_operand.<no memory space> [shape: f32[1], index: 6, kind: input, shape index: {}]
  %s7 = inlined_call_operand.<no memory space> [shape: f32[1], index: 7, kind: input, shape index: {}]
  %s8 = inlined_call_operand.vmem [shape: f32[2,8,32], index: 8, kind: output, shape index: {}]
  %s9 = sld [smem:[#allocation0]]
  $region73: #{encoder_forward.6} parent=0
    _
  %s11 = ssub.s32 1, %s9
  %s12 = scalar_select 0, %s11, %s9
  %13 = sst [smem:[#allocation3]] %s6
  %14 = sst [smem:[#allocation4]] %s7
  $region1: #{encoder_forward.6} parent=0
    #allocation5 [shape = 'u8[4096]{0}', space=smem, size = 0x1000, scoped, tag = 'input window, operand 4, single buffered']
    #allocation6 [shape = 's32[2]{0}', space=sflag, size = 0x8, scoped, tag = 'scoped memory for encoder_forward.6']
    #allocation7 [shape = 'u8[4096]{0}', space=smem, size = 0x1000, scoped, tag = 'input window, operand 5, single buffered']
    #allocation8 [shape = 's32[1]{0}', space=sflag, size = 0x4, scoped, tag = 'scoped memory for encoder_forward.6']
    %15 = vsyncpa [#allocation6], 0
    %16 = vsyncpa [#allocation8], 0
    loop: start=0, step=1, limit=4
    $region2: #{encoder_forward.6} parent=1 // loop_pre_header
      _
    $region3: #{encoder_forward.6} parent=1 // loop_header
      %s18 = sphi 0, %s22
      %p19 = scmp.ge.s32.totalorder %s18, 4
      %s25 = sphi 0, %s37
      %s26 = sphi 0, %s33
      %s27 = sphi 0, %s25
      %s28 = sphi 0, %s26
      %s29 = sphi 0, %s27
      %s30 = sphi 0, %s28
      %s42 = sphi 0, %s44
      %s45 = sphi 0, %s42
      %s46 = sphi 0, %s45
      %s62 = sphi 0, %s46
      %s68 = sphi 0, %s70
      %s71 = sphi 0, %s68
      %s72 = sphi 0, %s71
      %s88 = sphi 0, %s72
      %s96 = sphi 0, %s98
      %s99 = sphi 0, %s96
      %s100 = sphi 0, %s99
      %s116 = sphi 0, %s100
      %s120 = sphi 0, %s120
      %s122 = sphi 0, %s120
      %s123 = sphi 0, %s122
      %s137 = sphi 0, %s123
      %s141 = sphi 0, %s141
      %s143 = sphi 0, %s141
      %s144 = sphi 0, %s143
      %s158 = sphi 0, %s144
      %s162 = sphi 0, %s162
      %s164 = sphi 0, %s162
      %s165 = sphi 0, %s164
      %s179 = sphi 0, %s165
      %s183 = sphi 0, %s183
      %s185 = sphi 0, %s183
      %s186 = sphi 0, %s185
      %s200 = sphi 0, %s186
      %s204 = sphi 0, %s204
      %s206 = sphi 0, %s204
      %s207 = sphi 0, %s206
      %s221 = sphi 0, %s207
      %s229 = sphi 0, %s231
      %s232 = sphi 0, %s229
      %s233 = sphi 0, %s232
      %s249 = sphi 0, %s233
    $region4: #{encoder_forward.6} parent=1 // loop_header_branch
      %21 = sbr.rel (%p19) target = $region8
    $region5: #{encoder_forward.6} parent=1 // loop_body
      %s23 = ssub.s32 %s18, 1
      %s24 = ssub.s32 %s18, 2
      %s31 = sadd.s32 1, %s26
      %p32 = scmp.ge.s32.totalorder %s31, 1
      %s33 = scalar_select %p32, 0, %s31
      %s34 = sadd.s32 1, %s25
      %s35 = scalar_select %p32, %s34, %s25
      %p36 = scmp.ge.s32.totalorder %s35, 2
      %s37 = scalar_select %p36, 0, %s35
      %s38 = ssub.s32 %s25, %s37
      %s39 = ssub.s32 %s26, %s33
      %s40 = sor.u32 %s38, %s39
      %p41 = scmp.eq.s32.totalorder %s40, 0
      %s43 = sadd.s32 %s42, 1
      %s44 = scalar_select %p41, %s42, %s43
      %p47 = pneg %p41
      %p48 = scmp.eq.s32.totalorder %s18, 1
      %p49 = por %p47, %p48
      %p50 = scmp.ne.s32.totalorder %s42, %s45
      %p51 = scmp.eq.s32.totalorder %s18, 0
      %p52 = por %p50, %p51
      %p53 = scmp.ne.s32.totalorder %s42, %s45
      %p54 = scmp.eq.s32.totalorder %s23, 1
      %p55 = por %p53, %p54
      %p56 = scmp.ne.s32.totalorder %s45, %s46
      %p57 = scmp.eq.s32.totalorder %s23, 0
      %p58 = por %p56, %p57
      %p59 = scmp.ne.s32.totalorder %s45, %s46
      %p60 = scmp.eq.s32.totalorder %s24, 1
      %p61 = por %p59, %p60
      %p63 = scmp.ne.s32.totalorder %s46, %s62
      %p64 = scmp.eq.s32.totalorder %s24, 0
      %p65 = por %p63, %p64
      %s66 = ssub.s32 %s25, %s37
      %p67 = scmp.eq.s32.totalorder %s66, 0
      %s69 = sadd.s32 %s68, 1
      %s70 = scalar_select %p67, %s68, %s69
      %p73 = pneg %p67
      %p74 = scmp.eq.s32.totalorder %s18, 1
      %p75 = por %p73, %p74
      %p76 = scmp.ne.s32.totalorder %s68, %s71
      %p77 = scmp.eq.s32.totalorder %s18, 0
      %p78 = por %p76, %p77
      %p79 = scmp.ne.s32.totalorder %s68, %s71
      %p80 = scmp.eq.s32.totalorder %s23, 1
      %p81 = por %p79, %p80
      %p82 = scmp.ne.s32.totalorder %s71, %s72
      %p83 = scmp.eq.s32.totalorder %s23, 0
      %p84 = por %p82, %p83
      %p85 = scmp.ne.s32.totalorder %s71, %s72
      %p86 = scmp.eq.s32.totalorder %s24, 1
      %p87 = por %p85, %p86
      %p89 = scmp.ne.s32.totalorder %s72, %s88
      %p90 = scmp.eq.s32.totalorder %s24, 0
      %p91 = por %p89, %p90
      %s92 = ssub.s32 %s25, %s37
      %s93 = ssub.s32 %s26, %s33
      %s94 = sor.u32 %s92, %s93
      %p95 = scmp.eq.s32.totalorder %s94, 0
      %s97 = sadd.s32 %s96, 1
      %s98 = scalar_select %p95, %s96, %s97
      %p101 = pneg %p95
      %p102 = scmp.eq.s32.totalorder %s18, 1
      %p103 = por %p101, %p102
      %p104 = scmp.ne.s32.totalorder %s96, %s99
      %p105 = scmp.eq.s32.totalorder %s18, 0
      %p106 = por %p104, %p105
      %p107 = scmp.ne.s32.totalorder %s96, %s99
      %p108 = scmp.eq.s32.totalorder %s23, 1
      %p109 = por %p107, %p108
      %p110 = scmp.ne.s32.totalorder %s99, %s100
      %p111 = scmp.eq.s32.totalorder %s23, 0
      %p112 = por %p110, %p111
      %p113 = scmp.ne.s32.totalorder %s99, %s100
      %p114 = scmp.eq.s32.totalorder %s24, 1
      %p115 = por %p113, %p114
      %p117 = scmp.ne.s32.totalorder %s100, %s116
      %p118 = scmp.eq.s32.totalorder %s24, 0
      %p119 = por %p117, %p118
      %s121 = sadd.s32 %s120, 1
      %p124 = scmp.eq.s32.totalorder %s18, 1
      %p125 = scmp.ne.s32.totalorder %s120, %s122
      %p126 = scmp.eq.s32.totalorder %s18, 0
      %p127 = por %p125, %p126
      %p128 = scmp.ne.s32.totalorder %s120, %s122
      %p129 = scmp.eq.s32.totalorder %s23, 1
      %p130 = por %p128, %p129
      %p131 = scmp.ne.s32.totalorder %s122, %s123
      %p132 = scmp.eq.s32.totalorder %s23, 0
      %p133 = por %p131, %p132
      %p134 = scmp.ne.s32.totalorder %s122, %s123
      %p135 = scmp.eq.s32.totalorder %s24, 1
      %p136 = por %p134, %p135
      %p138 = scmp.ne.s32.totalorder %s123, %s137
      %p139 = scmp.eq.s32.totalorder %s24, 0
      %p140 = por %p138, %p139
      %s142 = sadd.s32 %s141, 1
      %p145 = scmp.eq.s32.totalorder %s18, 1
      %p146 = scmp.ne.s32.totalorder %s141, %s143
      %p147 = scmp.eq.s32.totalorder %s18, 0
      %p148 = por %p146, %p147
      %p149 = scmp.ne.s32.totalorder %s141, %s143
      %p150 = scmp.eq.s32.totalorder %s23, 1
      %p151 = por %p149, %p150
      %p152 = scmp.ne.s32.totalorder %s143, %s144
      %p153 = scmp.eq.s32.totalorder %s23, 0
      %p154 = por %p152, %p153
      %p155 = scmp.ne.s32.totalorder %s143, %s144
      %p156 = scmp.eq.s32.totalorder %s24, 1
      %p157 = por %p155, %p156
      %p159 = scmp.ne.s32.totalorder %s144, %s158
      %p160 = scmp.eq.s32.totalorder %s24, 0
      %p161 = por %p159, %p160
      %s163 = sadd.s32 %s162, 1
      %p166 = scmp.eq.s32.totalorder %s18, 1
      %p167 = scmp.ne.s32.totalorder %s162, %s164
      %p168 = scmp.eq.s32.totalorder %s18, 0
      %p169 = por %p167, %p168
      %p170 = scmp.ne.s32.totalorder %s162, %s164
      %p171 = scmp.eq.s32.totalorder %s23, 1
      %p172 = por %p170, %p171
      %p173 = scmp.ne.s32.totalorder %s164, %s165
      %p174 = scmp.eq.s32.totalorder %s23, 0
      %p175 = por %p173, %p174
      %p176 = scmp.ne.s32.totalorder %s164, %s165
      %p177 = scmp.eq.s32.totalorder %s24, 1
      %p178 = por %p176, %p177
      %p180 = scmp.ne.s32.totalorder %s165, %s179
      %p181 = scmp.eq.s32.totalorder %s24, 0
      %p182 = por %p180, %p181
      %s184 = sadd.s32 %s183, 1
      %p187 = scmp.eq.s32.totalorder %s18, 1
      %p188 = scmp.ne.s32.totalorder %s183, %s185
      %p189 = scmp.eq.s32.totalorder %s18, 0
      %p190 = por %p188, %p189
      %p191 = scmp.ne.s32.totalorder %s183, %s185
      %p192 = scmp.eq.s32.totalorder %s23, 1
      %p193 = por %p191, %p192
      %p194 = scmp.ne.s32.totalorder %s185, %s186
      %p195 = scmp.eq.s32.totalorder %s23, 0
      %p196 = por %p194, %p195
      %p197 = scmp.ne.s32.totalorder %s185, %s186
      %p198 = scmp.eq.s32.totalorder %s24, 1
      %p199 = por %p197, %p198
      %p201 = scmp.ne.s32.totalorder %s186, %s200
      %p202 = scmp.eq.s32.totalorder %s24, 0
      %p203 = por %p201, %p202
      %s205 = sadd.s32 %s204, 1
      %p208 = scmp.eq.s32.totalorder %s18, 1
      %p209 = scmp.ne.s32.totalorder %s204, %s206
      %p210 = scmp.eq.s32.totalorder %s18, 0
      %p211 = por %p209, %p210
      %p212 = scmp.ne.s32.totalorder %s204, %s206
      %p213 = scmp.eq.s32.totalorder %s23, 1
      %p214 = por %p212, %p213
      %p215 = scmp.ne.s32.totalorder %s206, %s207
      %p216 = scmp.eq.s32.totalorder %s23, 0
      %p217 = por %p215, %p216
      %p218 = scmp.ne.s32.totalorder %s206, %s207
      %p219 = scmp.eq.s32.totalorder %s24, 1
      %p220 = por %p218, %p219
      %p222 = scmp.ne.s32.totalorder %s207, %s221
      %p223 = scmp.eq.s32.totalorder %s24, 0
      %p224 = por %p222, %p223
      %s225 = ssub.s32 %s25, %s37
      %s226 = ssub.s32 %s26, %s33
      %s227 = sor.u32 %s225, %s226
      %p228 = scmp.eq.s32.totalorder %s227, 0
      %s230 = sadd.s32 %s229, 1
      %s231 = scalar_select %p228, %s229, %s230
      %p234 = pneg %p228
      %p235 = scmp.eq.s32.totalorder %s18, 1
      %p236 = por %p234, %p235
      %p237 = scmp.ne.s32.totalorder %s229, %s232
      %p238 = scmp.eq.s32.totalorder %s18, 0
      %p239 = por %p237, %p238
      %p240 = scmp.ne.s32.totalorder %s229, %s232
      %p241 = scmp.eq.s32.totalorder %s23, 1
      %p242 = por %p240, %p241
      %p243 = scmp.ne.s32.totalorder %s232, %s233
      %p244 = scmp.eq.s32.totalorder %s23, 0
      %p245 = por %p243, %p244
      %p246 = scmp.ne.s32.totalorder %s232, %s233
      %p247 = scmp.eq.s32.totalorder %s24, 1
      %p248 = por %p246, %p247
      %p250 = scmp.ne.s32.totalorder %s233, %s249
      %p251 = scmp.eq.s32.totalorder %s24, 0
      %p252 = por %p250, %p251
      %p253 = scmp.le.s32.totalorder 1, %s18
      %p254 = scmp.lt.s32.totalorder %s18, 3
      %p255 = pnand %p253, %p254
      %p256 = pneg %p255
      // Predicated region
      $region9: #{encoder_forward.6} parent=5 // pred_check
        _
      $region10: #{encoder_forward.6} parent=5 // pred_check_branch
        %258 = sbr.rel (%p255) target = $region12
      $region11: #{encoder_forward.6} parent=5 // pred_region
        %s259 = ssub.s32 %s18, 1
        // Predicated region
        $region13: #{encoder_forward.6} parent=11 // pred_check
          %p260 = pneg %p133
        $region14: #{encoder_forward.6} parent=11 // pred_check_branch
          %262 = sbr.rel (%p260) target = $region16
        $region15: #{encoder_forward.6} parent=11 // pred_region
          _
        $region16: #{encoder_forward.6} parent=11 // pred_fallthru
          _
        // Predicated region
        $region17: #{encoder_forward.6} parent=11 // pred_check
          %p263 = pneg %p154
        $region18: #{encoder_forward.6} parent=11 // pred_check_branch
          %265 = sbr.rel (%p263) target = $region20
        $region19: #{encoder_forward.6} parent=11 // pred_region
          %267 = vsyncadd [#allocation6], 0
          %s269 = sshll.u32 %s4, 4
          %s270 = int_to_ptr.vmem [resolvable:$true] %s269
          %272 = dma.vmem_to_smem %s270, 128, [#allocation5], [#allocation6]
        $region20: #{encoder_forward.6} parent=11 // pred_fallthru
          _
        // Predicated region
        $region21: #{encoder_forward.6} parent=11 // pred_check
          %p273 = pneg %p175
        $region22: #{encoder_forward.6} parent=11 // pred_check_branch
          %275 = sbr.rel (%p273) target = $region24
        $region23: #{encoder_forward.6} parent=11 // pred_region
          %277 = vsyncadd [#allocation8], 0
          %s279 = sshll.u32 %s5, 4
          %s280 = int_to_ptr.vmem [resolvable:$true] %s279
          %282 = dma.vmem_to_smem %s280, 128, [#allocation7], [#allocation8]
        $region24: #{encoder_forward.6} parent=11 // pred_fallthru
          _
        // Predicated region
        $region25: #{encoder_forward.6} parent=11 // pred_check
          %p283 = pneg %p196
        $region26: #{encoder_forward.6} parent=11 // pred_check_branch
          %285 = sbr.rel (%p283) target = $region28
        $region27: #{encoder_forward.6} parent=11 // pred_region
          _
        $region28: #{encoder_forward.6} parent=11 // pred_fallthru
          _
        // Predicated region
        $region29: #{encoder_forward.6} parent=11 // pred_check
          %p286 = pneg %p217
        $region30: #{encoder_forward.6} parent=11 // pred_check_branch
          %288 = sbr.rel (%p286) target = $region32
        $region31: #{encoder_forward.6} parent=11 // pred_region
          _
        $region32: #{encoder_forward.6} parent=11 // pred_fallthru
          _
      $region12: #{encoder_forward.6} parent=5 // pred_fallthru
        _
      %p289 = scmp.lt.s32.totalorder %s18, 2
      // Predicated region
      $region33: #{encoder_forward.6} parent=5 // pred_check
        %p290 = pneg %p289
      $region34: #{encoder_forward.6} parent=5 // pred_check_branch
        %292 = sbr.rel (%p290) target = $region36
      $region35: #{encoder_forward.6} parent=5 // pred_region
        // Predicated region
        $region37: #{encoder_forward.6} parent=35 // pred_check
          %p293 = pneg %p52
        $region38: #{encoder_forward.6} parent=35 // pred_check_branch
          %295 = sbr.rel (%p293) target = $region40
        $region39: #{encoder_forward.6} parent=35 // pred_region
          %p296 = scmp.lt.s32.totalorder %s25, 1
          %s297 = scalar_select %p296, %s25, 1
          %p298 = scmp.lt.s32.totalorder %s26, 0
          %s299 = scalar_select %p298, %s26, 0
          %s300 = sadd.s32 %s299, %s297
          %s301 = smul.addr %s300, 8
          %s302 = scalar_lea.vmem %s0, %s301
        $region40: #{encoder_forward.6} parent=35 // pred_fallthru
          _
        // Predicated region
        $region41: #{encoder_forward.6} parent=35 // pred_check
          %p303 = pneg %p78
        $region42: #{encoder_forward.6} parent=35 // pred_check_branch
          %305 = sbr.rel (%p303) target = $region44
        $region43: #{encoder_forward.6} parent=35 // pred_region
          %p306 = scmp.lt.s32.totalorder %s25, 1
          %s307 = scalar_select %p306, %s25, 1
          %s308 = smul.addr %s307, 8
          %s309 = scalar_lea.vmem %s1, %s308
        $region44: #{encoder_forward.6} parent=35 // pred_fallthru
          _
        // Predicated region
        $region45: #{encoder_forward.6} parent=35 // pred_check
          %p310 = pneg %p106
        $region46: #{encoder_forward.6} parent=35 // pred_check_branch
          %312 = sbr.rel (%p310) target = $region48
        $region47: #{encoder_forward.6} parent=35 // pred_region
          %p313 = scmp.lt.s32.totalorder %s25, 1
          %s314 = scalar_select %p313, %s25, 1
          %p315 = scmp.lt.s32.totalorder %s26, 0
          %s316 = scalar_select %p315, %s26, 0
          %s317 = sadd.s32 %s316, %s314
          %s318 = smul.addr %s317, 8
          %s319 = scalar_lea.vmem %s2, %s318
        $region48: #{encoder_forward.6} parent=35 // pred_fallthru
          _
      $region36: #{encoder_forward.6} parent=5 // pred_fallthru
        _
      %p320 = scmp.le.s32.totalorder 1, %s18
      %p321 = scmp.lt.s32.totalorder %s18, 3
      %p322 = pnand %p320, %p321
      %p323 = pneg %p322
      // Predicated region
      $region49: #{encoder_forward.6} parent=5 // pred_check
        _
      $region50: #{encoder_forward.6} parent=5 // pred_check_branch
        %325 = sbr.rel (%p322) target = $region52
      $region51: #{encoder_forward.6} parent=5 // pred_region
        %s326 = ssub.s32 %s18, 1
        // Predicated region
        $region53: #{encoder_forward.6} parent=51 // pred_check
          %p327 = pneg %p154
        $region54: #{encoder_forward.6} parent=51 // pred_check_branch
          %329 = sbr.rel (%p327) target = $region56
        $region55: #{encoder_forward.6} parent=51 // pred_region
          %331 = dma.done [#allocation6], 128
        $region56: #{encoder_forward.6} parent=51 // pred_fallthru
          _
        // Predicated region
        $region57: #{encoder_forward.6} parent=51 // pred_check
          %p332 = pneg %p175
        $region58: #{encoder_forward.6} parent=51 // pred_check_branch
          %334 = sbr.rel (%p332) target = $region60
        $region59: #{encoder_forward.6} parent=51 // pred_region
          %336 = dma.done [#allocation8], 128
        $region60: #{encoder_forward.6} parent=51 // pred_fallthru
          _
        %337 = sfence
        %p338 = scmp.lt.s32.totalorder %s27, 1
        %s339 = scalar_select %p338, %s27, 1
        %p340 = scmp.lt.s32.totalorder %s28, 0
        %s341 = scalar_select %p340, %s28, 0
        %s342 = sadd.s32 %s341, %s339
        %s343 = smul.addr %s342, 8
        %s344 = scalar_lea.vmem %s0, %s343
        %p345 = pneg %p58
        %p346 = pneg %p55
        %p347 = scmp.lt.s32.totalorder %s27, 1
        %s348 = scalar_select %p347, %s27, 1
        %s349 = smul.addr %s348, 8
        %s350 = scalar_lea.vmem %s1, %s349
        %p351 = pneg %p84
        %p352 = pneg %p81
        %p353 = scmp.lt.s32.totalorder %s27, 1
        %s354 = scalar_select %p353, %s27, 1
        %p355 = scmp.lt.s32.totalorder %s28, 0
        %s356 = scalar_select %p355, %s28, 0
        %s357 = sadd.s32 %s356, %s354
        %s358 = smul.addr %s357, 8
        %s359 = scalar_lea.vmem %s2, %s358
        %p360 = pneg %p112
        %p361 = pneg %p109
        %p362 = pneg %p133
        %p363 = pneg %p130
        %p364 = pneg %p154
        %p365 = pneg %p151
        %p366 = pneg %p175
        %p367 = pneg %p172
        %p368 = pneg %p196
        %p369 = pneg %p193
        %p370 = pneg %p217
        %p371 = pneg %p214
        %p372 = pneg %p245
        %p373 = pneg %p242
        %p374 = scmp.lt.s32.totalorder %s27, 1
        %s375 = scalar_select %p374, %s27, 1
        %p376 = scmp.lt.s32.totalorder %s28, 0
        %s377 = scalar_select %p376, %s28, 0
        %s378 = sadd.s32 %s377, %s375
        %s379 = smul.addr %s378, 8
        %s380 = scalar_lea.vmem %s8, %s379
        %p381 = scmp.lt.s32.totalorder %s27, 1
        %s382 = scalar_select %p381, %s27, 1
        %p383 = scmp.lt.s32.totalorder %s28, 0
        %s384 = scalar_select %p383, %s28, 0
        %s385 = sadd.s32 %s384, %s382
        %s386 = smul.addr %s385, 8
        %s387 = scalar_lea.vmem %s0, %s386
        %p388 = scmp.lt.s32.totalorder %s27, 1
        %s389 = scalar_select %p388, %s27, 1
        %s390 = smul.addr %s389, 8
        %s391 = scalar_lea.vmem %s1, %s390
        %p392 = scmp.lt.s32.totalorder %s27, 1
        %s393 = scalar_select %p392, %s27, 1
        %p394 = scmp.lt.s32.totalorder %s28, 0
        %s395 = scalar_select %p394, %s28, 0
        %s396 = sadd.s32 %s395, %s393
        %s397 = smul.addr %s396, 8
        %s398 = scalar_lea.vmem %s2, %s397
        %p399 = scmp.lt.s32.totalorder %s27, 1
        %s400 = scalar_select %p399, %s27, 1
        %p401 = scmp.lt.s32.totalorder %s28, 0
        %s402 = scalar_select %p401, %s28, 0
        %s403 = sadd.s32 %s402, %s400
        %s404 = smul.addr %s403, 8
        %s405 = scalar_lea.vmem %s8, %s404
        %v406 = vld [vmem:[%s387] sm:$0xff]
        %v407 = vld [vmem:[%s391] sm:$0xff]
        %v408 = vld [vmem:[%s398] sm:$0xff]
        %v409 = vld [vmem:[%s3] sm:$0xff]
        %v410 = vld [vmem:[%s3 + $0x8] sm:$0xff]
        %v411 = vld [vmem:[%s3 + $0x10] sm:$0xff]
        %v412 = vld [vmem:[%s3 + $0x18] sm:$0xff]
        %v413 = vld [vmem:[%s3 + $0x20] sm:$0xff]
        %v414 = vld [vmem:[%s3 + $0x28] sm:$0xff]
        %v415 = vld [vmem:[%s3 + $0x30] sm:$0xff]
        %v416 = vld [vmem:[%s3 + $0x38] sm:$0xff]
        %vm417 = vcmask 64512
        %v419 = vsel %vm417, %v406, 0
        %v422 = vsel %vm417, %v407, 0
        %424 = vmatpush.xpose.msra.mxu0 0.0
        %425 = vmatpush.xpose.msra.mxu0 0.0
        %426 = vmatpush.xpose.msra.mxu0 0.0
        %427 = vmatpush.xpose.msra.mxu0 0.0
        %428 = vmatpush.xpose.msra.mxu0 0.0
        %429 = vmatpush.xpose.msra.mxu0 0.0
        %430 = vmatpush.xpose.msra.mxu0 0.0
        %431 = vmatpush.xpose.msra.mxu0 0.0
        %432 = vmatpush.xpose.msra.mxu0 0.0
        %433 = vmatpush.xpose.msra.mxu0 0.0
        %434 = vmatpush.xpose.msra.mxu0 0.0
        %435 = vmatpush.xpose.msra.mxu0 0.0
        %436 = vmatpush.xpose.msra.mxu0 0.0
        %437 = vmatpush.xpose.msra.mxu0 0.0
        %438 = vmatpush.xpose.msra.mxu0 0.0
        %439 = vmatpush.xpose.msra.mxu0 %v422
        %440 = vmatmul.f32.gmra.mxu0 %v419
        %v441 = vpop.f32.mrf.mxu0
        %v442 = vadd.f32 0.0, %v441
        %443 = vdwg.mxu0
        %v444 = vsel %vm417, %v442, 0.0
        %445 = vadd.xlane.f32.xlu0 %v444
        %v446 = vpop.xlane.xlu0 %445
        %v447 = vmul.f32 %v442, %v442
        %v448 = vsel %vm417, %v447, 0.0
        %449 = vadd.xlane.f32.xlu0 %v448
        %v450 = vpop.xlane.xlu0 %449
        %v451 = vmul.f32 %v446, 0.125
        %v452 = vmul.f32 %v451, %v446
        %v453 = vsub.f32 %v450, %v452
        %v454 = vmul.f32 %v453, 0.14285715
        %v455 = vmax.f32 %v454, 0.0
        %s456 = sld [smem:[#allocation5]]
        %v457 = vadd.f32 %v455, 1e-08
        %v458 = vrsqrt.pop %v457
        %v459 = vmul.f32 %v458, %v457
        %v460 = vmul.f32 %v459, %v458
        %v461 = vmul.f32 0.5, %v460
        %v462 = vsub.f32 1.5, %v461
        %v463 = vmul.f32 %v458, %v462
        %vm464 = vweird.f32 %v457
        %vm465 = vweird.f32 %v458
        %vm466 = vmor %vm464, %vm465
        %v467 = vsel %vm466, %v458, %v463
        %v468 = vstv %s456
        %v469 = vmul.f32 %v468, %v467
        %s470 = sld [smem:[#allocation7]]
        %v471 = vmul.f32 %v469, %v451
        %v472 = vstv %s470
        %v473 = vsub.f32 %v472, %v471
        %v474 = vmul.f32 %v442, %v469
        %v475 = vadd.f32 %v474, %v473
        %v476 = vsel %vm417, %v475, -inf
        %477 = vmax.xlane.f32.xlu0 %v476
        %v478 = vpop.xlane.xlu0 %477
        %v479 = vsub.f32 %v475, %v478
        %v480 = vmul.f32 %v479, 1.442695
        %v481 = vpow.pop %v480
        %v482 = vsel %vm417, %v481, 0.0
        %483 = vadd.xlane.f32.xlu0 %v482
        %v484 = vpop.xlane.xlu0 %483
        %v485 = vrcp.pop %v484
        %v486 = vmul.f32 %v481, %v485
        %487 = vrot.lane.b32.xlu0 %v407, 64
        %v488 = vpop.permute.xlu0 %487
        %v491 = vsel %vm417, %v486, 0
        %493 = vmatpush.msra.mxu0 0.0
        %494 = vmatpush.msra.mxu0 0.0
        %495 = vmatpush.msra.mxu0 0.0
        %496 = vmatpush.msra.mxu0 0.0
        %497 = vmatpush.msra.mxu0 0.0
        %498 = vmatpush.msra.mxu0 0.0
        %499 = vmatpush.msra.mxu0 0.0
        %500 = vmatpush.msra.mxu0 0.0
        %501 = vmatpush.msra.mxu0 0.0
        %502 = vmatpush.msra.mxu0 0.0
        %503 = vmatpush.msra.mxu0 0.0
        %504 = vmatpush.msra.mxu0 0.0
        %505 = vmatpush.msra.mxu0 0.0
        %506 = vmatpush.msra.mxu0 0.0
        %507 = vmatpush.msra.mxu0 0.0
        %508 = vmatpush.msra.mxu0 %v488
        %509 = vmatmul.f32.gmra.mxu0 %v491
        %v510 = vpop.f32.mrf.mxu0
        %v511 = vadd.f32 0.0, %v510
        %512 = vdwg.mxu0
        %513 = vst.msk [vmem:[#allocation2] sm:$0xff] %vm417, %v511
        %514 = vrot.lane.b32.xlu0 %v406, 120
        %v515 = vpop.permute.xlu0 %514
        %516 = vrot.lane.b32.xlu0 %v407, 120
        %v517 = vpop.permute.xlu0 %516
        %v518 = vsel %vm417, %v515, 0
        %v520 = vsel %vm417, %v517, 0
        %522 = vmatpush.xpose.msra.mxu0 0.0
        %523 = vmatpush.xpose.msra.mxu0 0.0
        %524 = vmatpush.xpose.msra.mxu0 0.0
        %525 = vmatpush.xpose.msra.mxu0 0.0
        %526 = vmatpush.xpose.msra.mxu0 0.0
        %527 = vmatpush.xpose.msra.mxu0 0.0
        %528 = vmatpush.xpose.msra.mxu0 0.0
        %529 = vmatpush.xpose.msra.mxu0 0.0
        %530 = vmatpush.xpose.msra.mxu0 0.0
        %531 = vmatpush.xpose.msra.mxu0 0.0
        %532 = vmatpush.xpose.msra.mxu0 0.0
        %533 = vmatpush.xpose.msra.mxu0 0.0
        %534 = vmatpush.xpose.msra.mxu0 0.0
        %535 = vmatpush.xpose.msra.mxu0 0.0
        %536 = vmatpush.xpose.msra.mxu0 0.0
        %537 = vmatpush.xpose.msra.mxu0 %v520
        %538 = vmatmul.f32.gmra.mxu0 %v518
        %v539 = vpop.f32.mrf.mxu0
        %v540 = vadd.f32 0.0, %v539
        %541 = vdwg.mxu0
        %v542 = vsel %vm417, %v540, 0.0
        %543 = vadd.xlane.f32.xlu0 %v542
        %v544 = vpop.xlane.xlu0 %543
        %v545 = vmul.f32 %v540, %v540
        %v546 = vsel %vm417, %v545, 0.0
        %547 = vadd.xlane.f32.xlu0 %v546
        %v548 = vpop.xlane.xlu0 %547
        %v549 = vmul.f32 %v544, 0.125
        %v550 = vmul.f32 %v549, %v544
        %v551 = vsub.f32 %v548, %v550
        %v552 = vmul.f32 %v551, 0.14285715
        %v553 = vmax.f32 %v552, 0.0
        %s554 = sld [smem:[#allocation5 + $0x80]]
        %v555 = vadd.f32 %v553, 1e-08
        %v556 = vrsqrt.pop %v555
        %v557 = vmul.f32 %v556, %v555
        %v558 = vmul.f32 %v557, %v556
        %v559 = vmul.f32 0.5, %v558
        %v560 = vsub.f32 1.5, %v559
        %v561 = vmul.f32 %v556, %v560
        %vm562 = vweird.f32 %v555
        %vm563 = vweird.f32 %v556
        %vm564 = vmor %vm562, %vm563
        %v565 = vsel %vm564, %v556, %v561
        %v566 = vstv %s554
        %v567 = vmul.f32 %v566, %v565
        %s568 = sld [smem:[#allocation7 + $0x80]]
        %v569 = vmul.f32 %v567, %v549
        %v570 = vstv %s568
        %v571 = vsub.f32 %v570, %v569
        %v572 = vmul.f32 %v540, %v567
        %v573 = vadd.f32 %v572, %v571
        %v574 = vsel %vm417, %v573, -inf
        %575 = vmax.xlane.f32.xlu0 %v574
        %v576 = vpop.xlane.xlu0 %575
        %v577 = vsub.f32 %v573, %v576
        %v578 = vmul.f32 %v577, 1.442695
        %v579 = vpow.pop %v578
        %v580 = vsel %vm417, %v579, 0.0
        %581 = vadd.xlane.f32.xlu0 %v580
        %v582 = vpop.xlane.xlu0 %581
        %v583 = vrcp.pop %v582
        %v584 = vmul.f32 %v579, %v583
        %585 = vrot.lane.b32.xlu0 %v407, 56
        %v586 = vpop.permute.xlu0 %585
        %v589 = vsel %vm417, %v584, 0
        %591 = vmatpush.msra.mxu0 0.0
        %592 = vmatpush.msra.mxu0 0.0
        %593 = vmatpush.msra.mxu0 0.0
        %594 = vmatpush.msra.mxu0 0.0
        %595 = vmatpush.msra.mxu0 0.0
        %596 = vmatpush.msra.mxu0 0.0
        %597 = vmatpush.msra.mxu0 0.0
        %598 = vmatpush.msra.mxu0 0.0
        %599 = vmatpush.msra.mxu0 0.0
        %600 = vmatpush.msra.mxu0 0.0
        %601 = vmatpush.msra.mxu0 0.0
        %602 = vmatpush.msra.mxu0 0.0
        %603 = vmatpush.msra.mxu0 0.0
        %604 = vmatpush.msra.mxu0 0.0
        %605 = vmatpush.msra.mxu0 0.0
        %606 = vmatpush.msra.mxu0 %v586
        %607 = vmatmul.f32.gmra.mxu0 %v589
        %v608 = vpop.f32.mrf.mxu0
        %v609 = vadd.f32 0.0, %v608
        %610 = vdwg.mxu0
        %612 = vrot.lane.b32.xlu0 %v609, 8
        %v613 = vpop.permute.xlu0 %612
        %vm615 = vcmask 130112
        %616 = vst.msk [vmem:[#allocation2] sm:$0xff] %vm615, %v613
        %617 = vrot.lane.b32.xlu0 %v406, 112
        %v618 = vpop.permute.xlu0 %617
        %619 = vrot.lane.b32.xlu0 %v407, 112
        %v620 = vpop.permute.xlu0 %619
        %v621 = vsel %vm417, %v618, 0
        %v623 = vsel %vm417, %v620, 0
        %625 = vmatpush.xpose.msra.mxu0 0.0
        %626 = vmatpush.xpose.msra.mxu0 0.0
        %627 = vmatpush.xpose.msra.mxu0 0.0
        %628 = vmatpush.xpose.msra.mxu0 0.0
        %629 = vmatpush.xpose.msra.mxu0 0.0
        %630 = vmatpush.xpose.msra.mxu0 0.0
        %631 = vmatpush.xpose.msra.mxu0 0.0
        %632 = vmatpush.xpose.msra.mxu0 0.0
        %633 = vmatpush.xpose.msra.mxu0 0.0
        %634 = vmatpush.xpose.msra.mxu0 0.0
        %635 = vmatpush.xpose.msra.mxu0 0.0
        %636 = vmatpush.xpose.msra.mxu0 0.0
        %637 = vmatpush.xpose.msra.mxu0 0.0
        %638 = vmatpush.xpose.msra.mxu0 0.0
        %639 = vmatpush.xpose.msra.mxu0 0.0
        %640 = vmatpush.xpose.msra.mxu0 %v623
        %641 = vmatmul.f32.gmra.mxu0 %v621
        %v642 = vpop.f32.mrf.mxu0
        %v643 = vadd.f32 0.0, %v642
        %644 = vdwg.mxu0
        %v645 = vsel %vm417, %v643, 0.0
        %646 = vadd.xlane.f32.xlu0 %v645
        %v647 = vpop.xlane.xlu0 %646
        %v648 = vmul.f32 %v643, %v643
        %v649 = vsel %vm417, %v648, 0.0
        %650 = vadd.xlane.f32.xlu0 %v649
        %v651 = vpop.xlane.xlu0 %650
        %v652 = vmul.f32 %v647, 0.125
        %v653 = vmul.f32 %v652, %v647
        %v654 = vsub.f32 %v651, %v653
        %v655 = vmul.f32 %v654, 0.14285715
        %v656 = vmax.f32 %v655, 0.0
        %s657 = sld [smem:[#allocation5 + $0x100]]
        %v658 = vadd.f32 %v656, 1e-08
        %v659 = vrsqrt.pop %v658
        %v660 = vmul.f32 %v659, %v658
        %v661 = vmul.f32 %v660, %v659
        %v662 = vmul.f32 0.5, %v661
        %v663 = vsub.f32 1.5, %v662
        %v664 = vmul.f32 %v659, %v663
        %vm665 = vweird.f32 %v658
        %vm666 = vweird.f32 %v659
        %vm667 = vmor %vm665, %vm666
        %v668 = vsel %vm667, %v659, %v664
        %v669 = vstv %s657
        %v670 = vmul.f32 %v669, %v668
        %s671 = sld [smem:[#allocation7 + $0x100]]
        %v672 = vmul.f32 %v670, %v652
        %v673 = vstv %s671
        %v674 = vsub.f32 %v673, %v672
        %v675 = vmul.f32 %v643, %v670
        %v676 = vadd.f32 %v675, %v674
        %v677 = vsel %vm417, %v676, -inf
        %678 = vmax.xlane.f32.xlu0 %v677
        %v679 = vpop.xlane.xlu0 %678
        %v680 = vsub.f32 %v676, %v679
        %v681 = vmul.f32 %v680, 1.442695
        %v682 = vpow.pop %v681
        %v683 = vsel %vm417, %v682, 0.0
        %684 = vadd.xlane.f32.xlu0 %v683
        %v685 = vpop.xlane.xlu0 %684
        %v686 = vrcp.pop %v685
        %v687 = vmul.f32 %v682, %v686
        %688 = vrot.lane.b32.xlu0 %v407, 48
        %v689 = vpop.permute.xlu0 %688
        %v692 = vsel %vm417, %v687, 0
        %694 = vmatpush.msra.mxu0 0.0
        %695 = vmatpush.msra.mxu0 0.0
        %696 = vmatpush.msra.mxu0 0.0
        %697 = vmatpush.msra.mxu0 0.0
        %698 = vmatpush.msra.mxu0 0.0
        %699 = vmatpush.msra.mxu0 0.0
        %700 = vmatpush.msra.mxu0 0.0
        %701 = vmatpush.msra.mxu0 0.0
        %702 = vmatpush.msra.mxu0 0.0
        %703 = vmatpush.msra.mxu0 0.0
        %704 = vmatpush.msra.mxu0 0.0
        %705 = vmatpush.msra.mxu0 0.0
        %706 = vmatpush.msra.mxu0 0.0
        %707 = vmatpush.msra.mxu0 0.0
        %708 = vmatpush.msra.mxu0 0.0
        %709 = vmatpush.msra.mxu0 %v689
        %710 = vmatmul.f32.gmra.mxu0 %v692
        %v711 = vpop.f32.mrf.mxu0
        %v712 = vadd.f32 0.0, %v711
        %713 = vdwg.mxu0
        %715 = vrot.lane.b32.xlu0 %v712, 16
        %v716 = vpop.permute.xlu0 %715
        %vm718 = vcmask 195712
        %719 = vst.msk [vmem:[#allocation2] sm:$0xff] %vm718, %v716
        %720 = vrot.lane.b32.xlu0 %v406, 104
        %v721 = vpop.permute.xlu0 %720
        %722 = vrot.lane.b32.xlu0 %v407, 104
        %v723 = vpop.permute.xlu0 %722
        %v724 = vsel %vm417, %v721, 0
        %v726 = vsel %vm417, %v723, 0
        %728 = vmatpush.xpose.msra.mxu0 0.0
        %729 = vmatpush.xpose.msra.mxu0 0.0
        %730 = vmatpush.xpose.msra.mxu0 0.0
        %731 = vmatpush.xpose.msra.mxu0 0.0
        %732 = vmatpush.xpose.msra.mxu0 0.0
        %733 = vmatpush.xpose.msra.mxu0 0.0
        %734 = vmatpush.xpose.msra.mxu0 0.0
        %735 = vmatpush.xpose.msra.mxu0 0.0
        %736 = vmatpush.xpose.msra.mxu0 0.0
        %737 = vmatpush.xpose.msra.mxu0 0.0
        %738 = vmatpush.xpose.msra.mxu0 0.0
        %739 = vmatpush.xpose.msra.mxu0 0.0
        %740 = vmatpush.xpose.msra.mxu0 0.0
        %741 = vmatpush.xpose.msra.mxu0 0.0
        %742 = vmatpush.xpose.msra.mxu0 0.0
        %743 = vmatpush.xpose.msra.mxu0 %v726
        %744 = vmatmul.f32.gmra.mxu0 %v724
        %v745 = vpop.f32.mrf.mxu0
        %v746 = vadd.f32 0.0, %v745
        %747 = vdwg.mxu0
        %v748 = vsel %vm417, %v746, 0.0
        %749 = vadd.xlane.f32.xlu0 %v748
        %v750 = vpop.xlane.xlu0 %749
        %v751 = vmul.f32 %v746, %v746
        %v752 = vsel %vm417, %v751, 0.0
        %753 = vadd.xlane.f32.xlu0 %v752
        %v754 = vpop.xlane.xlu0 %753
        %v755 = vmul.f32 %v750, 0.125
        %v756 = vmul.f32 %v755, %v750
        %v757 = vsub.f32 %v754, %v756
        %v758 = vmul.f32 %v757, 0.14285715
        %v759 = vmax.f32 %v758, 0.0
        %s760 = sld [smem:[#allocation5 + $0x180]]
        %v761 = vadd.f32 %v759, 1e-08
        %v762 = vrsqrt.pop %v761
        %v763 = vmul.f32 %v762, %v761
        %v764 = vmul.f32 %v763, %v762
        %v765 = vmul.f32 0.5, %v764
        %v766 = vsub.f32 1.5, %v765
        %v767 = vmul.f32 %v762, %v766
        %vm768 = vweird.f32 %v761
        %vm769 = vweird.f32 %v762
        %vm770 = vmor %vm768, %vm769
        %v771 = vsel %vm770, %v762, %v767
        %v772 = vstv %s760
        %v773 = vmul.f32 %v772, %v771
        %s774 = sld [smem:[#allocation7 + $0x180]]
        %v775 = vmul.f32 %v773, %v755
        %v776 = vstv %s774
        %v777 = vsub.f32 %v776, %v775
        %v778 = vmul.f32 %v746, %v773
        %v779 = vadd.f32 %v778, %v777
        %v780 = vsel %vm417, %v779, -inf
        %781 = vmax.xlane.f32.xlu0 %v780
        %v782 = vpop.xlane.xlu0 %781
        %v783 = vsub.f32 %v779, %v782
        %v784 = vmul.f32 %v783, 1.442695
        %v785 = vpow.pop %v784
        %v786 = vsel %vm417, %v785, 0.0
        %787 = vadd.xlane.f32.xlu0 %v786
        %v788 = vpop.xlane.xlu0 %787
        %v789 = vrcp.pop %v788
        %v790 = vmul.f32 %v785, %v789
        %791 = vrot.lane.b32.xlu0 %v407, 40
        %v792 = vpop.permute.xlu0 %791
        %v795 = vsel %vm417, %v790, 0
        %797 = vmatpush.msra.mxu0 0.0
        %798 = vmatpush.msra.mxu0 0.0
        %799 = vmatpush.msra.mxu0 0.0
        %800 = vmatpush.msra.mxu0 0.0
        %801 = vmatpush.msra.mxu0 0.0
        %802 = vmatpush.msra.mxu0 0.0
        %803 = vmatpush.msra.mxu0 0.0
        %804 = vmatpush.msra.mxu0 0.0
        %805 = vmatpush.msra.mxu0 0.0
        %806 = vmatpush.msra.mxu0 0.0
        %807 = vmatpush.msra.mxu0 0.0
        %808 = vmatpush.msra.mxu0 0.0
        %809 = vmatpush.msra.mxu0 0.0
        %810 = vmatpush.msra.mxu0 0.0
        %811 = vmatpush.msra.mxu0 0.0
        %812 = vmatpush.msra.mxu0 %v792
        %813 = vmatmul.f32.gmra.mxu0 %v795
        %v814 = vpop.f32.mrf.mxu0
        %v815 = vadd.f32 0.0, %v814
        %816 = vdwg.mxu0
        %818 = vrot.lane.b32.xlu0 %v815, 24
        %v819 = vpop.permute.xlu0 %818
        %vm821 = vcmask 261312
        %822 = vst.msk [vmem:[#allocation2] sm:$0xff] %vm821, %v819
        %823 = vrot.lane.b32.xlu0 %v406, 96
        %v824 = vpop.permute.xlu0 %823
        %825 = vrot.lane.b32.xlu0 %v407, 96
        %v826 = vpop.permute.xlu0 %825
        %v827 = vsel %vm417, %v824, 0
        %v829 = vsel %vm417, %v826, 0
        %831 = vmatpush.xpose.msra.mxu0 0.0
        %832 = vmatpush.xpose.msra.mxu0 0.0
        %833 = vmatpush.xpose.msra.mxu0 0.0
        %834 = vmatpush.xpose.msra.mxu0 0.0
        %835 = vmatpush.xpose.msra.mxu0 0.0
        %836 = vmatpush.xpose.msra.mxu0 0.0
        %837 = vmatpush.xpose.msra.mxu0 0.0
        %838 = vmatpush.xpose.msra.mxu0 0.0
        %839 = vmatpush.xpose.msra.mxu0 0.0
        %840 = vmatpush.xpose.msra.mxu0 0.0
        %841 = vmatpush.xpose.msra.mxu0 0.0
        %842 = vmatpush.xpose.msra.mxu0 0.0
        %843 = vmatpush.xpose.msra.mxu0 0.0
        %844 = vmatpush.xpose.msra.mxu0 0.0
        %845 = vmatpush.xpose.msra.mxu0 0.0
        %846 = vmatpush.xpose.msra.mxu0 %v829
        %847 = vmatmul.f32.gmra.mxu0 %v827
        %v848 = vpop.f32.mrf.mxu0
        %v849 = vadd.f32 0.0, %v848
        %850 = vdwg.mxu0
        %v851 = vsel %vm417, %v849, 0.0
        %852 = vadd.xlane.f32.xlu0 %v851
        %v853 = vpop.xlane.xlu0 %852
        %v854 = vmul.f32 %v849, %v849
        %v855 = vsel %vm417, %v854, 0.0
        %856 = vadd.xlane.f32.xlu0 %v855
        %v857 = vpop.xlane.xlu0 %856
        %v858 = vmul.f32 %v853, 0.125
        %v859 = vmul.f32 %v858, %v853
        %v860 = vsub.f32 %v857, %v859
        %v861 = vmul.f32 %v860, 0.14285715
        %v862 = vmax.f32 %v861, 0.0
        %s863 = sld [smem:[#allocation5 + $0x200]]
        %v864 = vadd.f32 %v862, 1e-08
        %v865 = vrsqrt.pop %v864
        %v866 = vmul.f32 %v865, %v864
        %v867 = vmul.f32 %v866, %v865
        %v868 = vmul.f32 0.5, %v867
        %v869 = vsub.f32 1.5, %v868
        %v870 = vmul.f32 %v865, %v869
        %vm871 = vweird.f32 %v864
        %vm872 = vweird.f32 %v865
        %vm873 = vmor %vm871, %vm872
        %v874 = vsel %vm873, %v865, %v870
        %v875 = vstv %s863
        %v876 = vmul.f32 %v875, %v874
        %s877 = sld [smem:[#allocation7 + $0x200]]
        %v878 = vmul.f32 %v876, %v858
        %v879 = vstv %s877
        %v880 = vsub.f32 %v879, %v878
        %v881 = vmul.f32 %v849, %v876
        %v882 = vadd.f32 %v881, %v880
        %v883 = vsel %vm417, %v882, -inf
        %884 = vmax.xlane.f32.xlu0 %v883
        %v885 = vpop.xlane.xlu0 %884
        %v886 = vsub.f32 %v882, %v885
        %v887 = vmul.f32 %v886, 1.442695
        %v888 = vpow.pop %v887
        %v889 = vsel %vm417, %v888, 0.0
        %890 = vadd.xlane.f32.xlu0 %v889
        %v891 = vpop.xlane.xlu0 %890
        %v892 = vrcp.pop %v891
        %v893 = vmul.f32 %v888, %v892
        %894 = vrot.lane.b32.xlu0 %v407, 32
        %v895 = vpop.permute.xlu0 %894
        %v898 = vsel %vm417, %v893, 0
        %900 = vmatpush.msra.mxu0 0.0
        %901 = vmatpush.msra.mxu0 0.0
        %902 = vmatpush.msra.mxu0 0.0
        %903 = vmatpush.msra.mxu0 0.0
        %904 = vmatpush.msra.mxu0 0.0
        %905 = vmatpush.msra.mxu0 0.0
        %906 = vmatpush.msra.mxu0 0.0
        %907 = vmatpush.msra.mxu0 0.0
        %908 = vmatpush.msra.mxu0 0.0
        %909 = vmatpush.msra.mxu0 0.0
        %910 = vmatpush.msra.mxu0 0.0
        %911 = vmatpush.msra.mxu0 0.0
        %912 = vmatpush.msra.mxu0 0.0
        %913 = vmatpush.msra.mxu0 0.0
        %914 = vmatpush.msra.mxu0 0.0
        %915 = vmatpush.msra.mxu0 %v895
        %916 = vmatmul.f32.gmra.mxu0 %v898
        %v917 = vpop.f32.mrf.mxu0
        %v918 = vadd.f32 0.0, %v917
        %919 = vdwg.mxu0
        %921 = vrot.lane.b32.xlu0 %v918, 32
        %v922 = vpop.permute.xlu0 %921
        %vm924 = vcmask 326912
        %925 = vst.msk [vmem:[#allocation2] sm:$0xff] %vm924, %v922
        %926 = vrot.lane.b32.xlu0 %v406, 88
        %v927 = vpop.permute.xlu0 %926
        %928 = vrot.lane.b32.xlu0 %v407, 88
        %v929 = vpop.permute.xlu0 %928
        %v930 = vsel %vm417, %v927, 0
        %v932 = vsel %vm417, %v929, 0
        %934 = vmatpush.xpose.msra.mxu0 0.0
        %935 = vmatpush.xpose.msra.mxu0 0.0
        %936 = vmatpush.xpose.msra.mxu0 0.0
        %937 = vmatpush.xpose.msra.mxu0 0.0
        %938 = vmatpush.xpose.msra.mxu0 0.0
        %939 = vmatpush.xpose.msra.mxu0 0.0
        %940 = vmatpush.xpose.msra.mxu0 0.0
        %941 = vmatpush.xpose.msra.mxu0 0.0
        %942 = vmatpush.xpose.msra.mxu0 0.0
        %943 = vmatpush.xpose.msra.mxu0 0.0
        %944 = vmatpush.xpose.msra.mxu0 0.0
        %945 = vmatpush.xpose.msra.mxu0 0.0
        %946 = vmatpush.xpose.msra.mxu0 0.0
        %947 = vmatpush.xpose.msra.mxu0 0.0
        %948 = vmatpush.xpose.msra.mxu0 0.0
        %949 = vmatpush.xpose.msra.mxu0 %v932
        %950 = vmatmul.f32.gmra.mxu0 %v930
        %v951 = vpop.f32.mrf.mxu0
        %v952 = vadd.f32 0.0, %v951
        %953 = vdwg.mxu0
        %v954 = vsel %vm417, %v952, 0.0
        %955 = vadd.xlane.f32.xlu0 %v954
        %v956 = vpop.xlane.xlu0 %955
        %v957 = vmul.f32 %v952, %v952
        %v958 = vsel %vm417, %v957, 0.0
        %959 = vadd.xlane.f32.xlu0 %v958
        %v960 = vpop.xlane.xlu0 %959
        %v961 = vmul.f32 %v956, 0.125
        %v962 = vmul.f32 %v961, %v956
        %v963 = vsub.f32 %v960, %v962
        %v964 = vmul.f32 %v963, 0.14285715
        %v965 = vmax.f32 %v964, 0.0
        %s966 = sld [smem:[#allocation5 + $0x280]]
        %v967 = vadd.f32 %v965, 1e-08
        %v968 = vrsqrt.pop %v967
        %v969 = vmul.f32 %v968, %v967
        %v970 = vmul.f32 %v969, %v968
        %v971 = vmul.f32 0.5, %v970
        %v972 = vsub.f32 1.5, %v971
        %v973 = vmul.f32 %v968, %v972
        %vm974 = vweird.f32 %v967
        %vm975 = vweird.f32 %v968
        %vm976 = vmor %vm974, %vm975
        %v977 = vsel %vm976, %v968, %v973
        %v978 = vstv %s966
        %v979 = vmul.f32 %v978, %v977
        %s980 = sld [smem:[#allocation7 + $0x280]]
        %v981 = vmul.f32 %v979, %v961
        %v982 = vstv %s980
        %v983 = vsub.f32 %v982, %v981
        %v984 = vmul.f32 %v952, %v979
        %v985 = vadd.f32 %v984, %v983
        %v986 = vsel %vm417, %v985, -inf
        %987 = vmax.xlane.f32.xlu0 %v986
        %v988 = vpop.xlane.xlu0 %987
        %v989 = vsub.f32 %v985, %v988
        %v990 = vmul.f32 %v989, 1.442695
        %v991 = vpow.pop %v990
        %v992 = vsel %vm417, %v991, 0.0
        %993 = vadd.xlane.f32.xlu0 %v992
        %v994 = vpop.xlane.xlu0 %993
        %v995 = vrcp.pop %v994
        %v996 = vmul.f32 %v991, %v995
        %997 = vrot.lane.b32.xlu0 %v407, 24
        %v998 = vpop.permute.xlu0 %997
        %v1001 = vsel %vm417, %v996, 0
        %1003 = vmatpush.msra.mxu0 0.0
        %1004 = vmatpush.msra.mxu0 0.0
        %1005 = vmatpush.msra.mxu0 0.0
        %1006 = vmatpush.msra.mxu0 0.0
        %1007 = vmatpush.msra.mxu0 0.0
        %1008 = vmatpush.msra.mxu0 0.0
        %1009 = vmatpush.msra.mxu0 0.0
        %1010 = vmatpush.msra.mxu0 0.0
        %1011 = vmatpush.msra.mxu0 0.0
        %1012 = vmatpush.msra.mxu0 0.0
        %1013 = vmatpush.msra.mxu0 0.0
        %1014 = vmatpush.msra.mxu0 0.0
        %1015 = vmatpush.msra.mxu0 0.0
        %1016 = vmatpush.msra.mxu0 0.0
        %1017 = vmatpush.msra.mxu0 0.0
        %1018 = vmatpush.msra.mxu0 %v998
        %1019 = vmatmul.f32.gmra.mxu0 %v1001
        %v1020 = vpop.f32.mrf.mxu0
        %v1021 = vadd.f32 0.0, %v1020
        %1022 = vdwg.mxu0
        %1024 = vrot.lane.b32.xlu0 %v1021, 40
        %v1025 = vpop.permute.xlu0 %1024
        %vm1027 = vcmask 392512
        %1028 = vst.msk [vmem:[#allocation2] sm:$0xff] %vm1027, %v1025
        %1029 = vrot.lane.b32.xlu0 %v406, 80
        %v1030 = vpop.permute.xlu0 %1029
        %1031 = vrot.lane.b32.xlu0 %v407, 80
        %v1032 = vpop.permute.xlu0 %1031
        %v1033 = vsel %vm417, %v1030, 0
        %v1035 = vsel %vm417, %v1032, 0
        %1037 = vmatpush.xpose.msra.mxu0 0.0
        %1038 = vmatpush.xpose.msra.mxu0 0.0
        %1039 = vmatpush.xpose.msra.mxu0 0.0
        %1040 = vmatpush.xpose.msra.mxu0 0.0
        %1041 = vmatpush.xpose.msra.mxu0 0.0
        %1042 = vmatpush.xpose.msra.mxu0 0.0
        %1043 = vmatpush.xpose.msra.mxu0 0.0
        %1044 = vmatpush.xpose.msra.mxu0 0.0
        %1045 = vmatpush.xpose.msra.mxu0 0.0
        %1046 = vmatpush.xpose.msra.mxu0 0.0
        %1047 = vmatpush.xpose.msra.mxu0 0.0
        %1048 = vmatpush.xpose.msra.mxu0 0.0
        %1049 = vmatpush.xpose.msra.mxu0 0.0
        %1050 = vmatpush.xpose.msra.mxu0 0.0
        %1051 = vmatpush.xpose.msra.mxu0 0.0
        %1052 = vmatpush.xpose.msra.mxu0 %v1035
        %1053 = vmatmul.f32.gmra.mxu0 %v1033
        %v1054 = vpop.f32.mrf.mxu0
        %v1055 = vadd.f32 0.0, %v1054
        %1056 = vdwg.mxu0
        %v1057 = vsel %vm417, %v1055, 0.0
        %1058 = vadd.xlane.f32.xlu0 %v1057
        %v1059 = vpop.xlane.xlu0 %1058
        %v1060 = vmul.f32 %v1055, %v1055
        %v1061 = vsel %vm417, %v1060, 0.0
        %1062 = vadd.xlane.f32.xlu0 %v1061
        %v1063 = vpop.xlane.xlu0 %1062
        %v1064 = vmul.f32 %v1059, 0.125
        %v1065 = vmul.f32 %v1064, %v1059
        %v1066 = vsub.f32 %v1063, %v1065
        %v1067 = vmul.f32 %v1066, 0.14285715
        %v1068 = vmax.f32 %v1067, 0.0
        %s1069 = sld [smem:[#allocation5 + $0x300]]
        %v1070 = vadd.f32 %v1068, 1e-08
        %v1071 = vrsqrt.pop %v1070
        %v1072 = vmul.f32 %v1071, %v1070
        %v1073 = vmul.f32 %v1072, %v1071
        %v1074 = vmul.f32 0.5, %v1073
        %v1075 = vsub.f32 1.5, %v1074
        %v1076 = vmul.f32 %v1071, %v1075
        %vm1077 = vweird.f32 %v1070
        %vm1078 = vweird.f32 %v1071
        %vm1079 = vmor %vm1077, %vm1078
        %v1080 = vsel %vm1079, %v1071, %v1076
        %v1081 = vstv %s1069
        %v1082 = vmul.f32 %v1081, %v1080
        %s1083 = sld [smem:[#allocation7 + $0x300]]
        %v1084 = vmul.f32 %v1082, %v1064
        %v1085 = vstv %s1083
        %v1086 = vsub.f32 %v1085, %v1084
        %v1087 = vmul.f32 %v1055, %v1082
        %v1088 = vadd.f32 %v1087, %v1086
        %v1089 = vsel %vm417, %v1088, -inf
        %1090 = vmax.xlane.f32.xlu0 %v1089
        %v1091 = vpop.xlane.xlu0 %1090
        %v1092 = vsub.f32 %v1088, %v1091
        %v1093 = vmul.f32 %v1092, 1.442695
        %v1094 = vpow.pop %v1093
        %v1095 = vsel %vm417, %v1094, 0.0
        %1096 = vadd.xlane.f32.xlu0 %v1095
        %v1097 = vpop.xlane.xlu0 %1096
        %v1098 = vrcp.pop %v1097
        %v1099 = vmul.f32 %v1094, %v1098
        %1100 = vrot.lane.b32.xlu0 %v407, 16
        %v1101 = vpop.permute.xlu0 %1100
        %v1104 = vsel %vm417, %v1099, 0
        %1106 = vmatpush.msra.mxu0 0.0
        %1107 = vmatpush.msra.mxu0 0.0
        %1108 = vmatpush.msra.mxu0 0.0
        %1109 = vmatpush.msra.mxu0 0.0
        %1110 = vmatpush.msra.mxu0 0.0
        %1111 = vmatpush.msra.mxu0 0.0
        %1112 = vmatpush.msra.mxu0 0.0
        %1113 = vmatpush.msra.mxu0 0.0
        %1114 = vmatpush.msra.mxu0 0.0
        %1115 = vmatpush.msra.mxu0 0.0
        %1116 = vmatpush.msra.mxu0 0.0
        %1117 = vmatpush.msra.mxu0 0.0
        %1118 = vmatpush.msra.mxu0 0.0
        %1119 = vmatpush.msra.mxu0 0.0
        %1120 = vmatpush.msra.mxu0 0.0
        %1121 = vmatpush.msra.mxu0 %v1101
        %1122 = vmatmul.f32.gmra.mxu0 %v1104
        %v1123 = vpop.f32.mrf.mxu0
        %v1124 = vadd.f32 0.0, %v1123
        %1125 = vdwg.mxu0
        %1127 = vrot.lane.b32.xlu0 %v1124, 48
        %v1128 = vpop.permute.xlu0 %1127
        %vm1130 = vcmask 458112
        %1131 = vst.msk [vmem:[#allocation2] sm:$0xff] %vm1130, %v1128
        %1132 = vrot.lane.b32.xlu0 %v406, 72
        %v1133 = vpop.permute.xlu0 %1132
        %1134 = vrot.lane.b32.xlu0 %v407, 72
        %v1135 = vpop.permute.xlu0 %1134
        %v1136 = vsel %vm417, %v1133, 0
        %v1138 = vsel %vm417, %v1135, 0
        %1140 = vmatpush.xpose.msra.mxu0 0.0
        %1141 = vmatpush.xpose.msra.mxu0 0.0
        %1142 = vmatpush.xpose.msra.mxu0 0.0
        %1143 = vmatpush.xpose.msra.mxu0 0.0
        %1144 = vmatpush.xpose.msra.mxu0 0.0
        %1145 = vmatpush.xpose.msra.mxu0 0.0
        %1146 = vmatpush.xpose.msra.mxu0 0.0
        %1147 = vmatpush.xpose.msra.mxu0 0.0
        %1148 = vmatpush.xpose.msra.mxu0 0.0
        %1149 = vmatpush.xpose.msra.mxu0 0.0
        %1150 = vmatpush.xpose.msra.mxu0 0.0
        %1151 = vmatpush.xpose.msra.mxu0 0.0
        %1152 = vmatpush.xpose.msra.mxu0 0.0
        %1153 = vmatpush.xpose.msra.mxu0 0.0
        %1154 = vmatpush.xpose.msra.mxu0 0.0
        %1155 = vmatpush.xpose.msra.mxu0 %v1138
        %1156 = vmatmul.f32.gmra.mxu0 %v1136
        %v1157 = vpop.f32.mrf.mxu0
        %v1158 = vadd.f32 0.0, %v1157
        %1159 = vdwg.mxu0
        %v1160 = vsel %vm417, %v1158, 0.0
        %1161 = vadd.xlane.f32.xlu0 %v1160
        %v1162 = vpop.xlane.xlu0 %1161
        %v1163 = vmul.f32 %v1158, %v1158
        %v1164 = vsel %vm417, %v1163, 0.0
        %1165 = vadd.xlane.f32.xlu0 %v1164
        %v1166 = vpop.xlane.xlu0 %1165
        %v1167 = vmul.f32 %v1162, 0.125
        %v1168 = vmul.f32 %v1167, %v1162
        %v1169 = vsub.f32 %v1166, %v1168
        %v1170 = vmul.f32 %v1169, 0.14285715
        %v1171 = vmax.f32 %v1170, 0.0
        %s1172 = sld [smem:[#allocation5 + $0x380]]
        %v1173 = vadd.f32 %v1171, 1e-08
        %v1174 = vrsqrt.pop %v1173
        %v1175 = vmul.f32 %v1174, %v1173
        %v1176 = vmul.f32 %v1175, %v1174
        %v1177 = vmul.f32 0.5, %v1176
        %v1178 = vsub.f32 1.5, %v1177
        %v1179 = vmul.f32 %v1174, %v1178
        %vm1180 = vweird.f32 %v1173
        %vm1181 = vweird.f32 %v1174
        %vm1182 = vmor %vm1180, %vm1181
        %v1183 = vsel %vm1182, %v1174, %v1179
        %v1184 = vstv %s1172
        %v1185 = vmul.f32 %v1184, %v1183
        %s1186 = sld [smem:[#allocation7 + $0x380]]
        %v1187 = vmul.f32 %v1185, %v1167
        %v1188 = vstv %s1186
        %v1189 = vsub.f32 %v1188, %v1187
        %v1190 = vmul.f32 %v1158, %v1185
        %v1191 = vadd.f32 %v1190, %v1189
        %v1192 = vsel %vm417, %v1191, -inf
        %1193 = vmax.xlane.f32.xlu0 %v1192
        %v1194 = vpop.xlane.xlu0 %1193
        %v1195 = vsub.f32 %v1191, %v1194
        %v1196 = vmul.f32 %v1195, 1.442695
        %v1197 = vpow.pop %v1196
        %v1198 = vsel %vm417, %v1197, 0.0
        %1199 = vadd.xlane.f32.xlu0 %v1198
        %v1200 = vpop.xlane.xlu0 %1199
        %v1201 = vrcp.pop %v1200
        %v1202 = vmul.f32 %v1197, %v1201
        %1203 = vrot.lane.b32.xlu0 %v407, 8
        %v1204 = vpop.permute.xlu0 %1203
        %v1207 = vsel %vm417, %v1202, 0
        %1209 = vmatpush.msra.mxu0 0.0
        %1210 = vmatpush.msra.mxu0 0.0
        %1211 = vmatpush.msra.mxu0 0.0
        %1212 = vmatpush.msra.mxu0 0.0
        %1213 = vmatpush.msra.mxu0 0.0
        %1214 = vmatpush.msra.mxu0 0.0
        %1215 = vmatpush.msra.mxu0 0.0
        %1216 = vmatpush.msra.mxu0 0.0
        %1217 = vmatpush.msra.mxu0 0.0
        %1218 = vmatpush.msra.mxu0 0.0
        %1219 = vmatpush.msra.mxu0 0.0
        %1220 = vmatpush.msra.mxu0 0.0
        %1221 = vmatpush.msra.mxu0 0.0
        %1222 = vmatpush.msra.mxu0 0.0
        %1223 = vmatpush.msra.mxu0 0.0
        %1224 = vmatpush.msra.mxu0 %v1204
        %1225 = vmatmul.f32.gmra.mxu0 %v1207
        %v1226 = vpop.f32.mrf.mxu0
        %v1227 = vadd.f32 0.0, %v1226
        %1228 = vdwg.mxu0
        %1230 = vrot.lane.b32.xlu0 %v1227, 56
        %v1231 = vpop.permute.xlu0 %1230
        %vm1233 = vcmask 523712
        %1234 = vst.msk [vmem:[#allocation2] sm:$0xff] %vm1233, %v1231
        %v1235 = vld [vmem:[#allocation2] sm:$0xff]
        %vm1236 = vcmask 523264
        %v1238 = vsel %vm1236, %v1235, 0
        %1240 = vmatpush.msra.mxu0 0.0
        %1241 = vmatpush.msra.mxu0 0.0
        %1242 = vmatpush.msra.mxu0 0.0
        %1243 = vmatpush.msra.mxu0 0.0
        %1244 = vmatpush.msra.mxu0 0.0
        %1245 = vmatpush.msra.mxu0 0.0
        %1246 = vmatpush.msra.mxu0 0.0
        %1247 = vmatpush.msra.mxu0 0.0
        %1248 = vmatpush.msra.mxu0 %v416
        %1249 = vmatpush.msra.mxu0 %v415
        %1250 = vmatpush.msra.mxu0 %v414
        %1251 = vmatpush.msra.mxu0 %v413
        %1252 = vmatpush.msra.mxu0 %v412
        %1253 = vmatpush.msra.mxu0 %v411
        %1254 = vmatpush.msra.mxu0 %v410
        %1255 = vmatpush.msra.mxu0 %v409
        %1256 = vmatmul.f32.gmra.mxu0 %v1238
        %v1257 = vpop.f32.mrf.mxu0
        %v1258 = vadd.f32 %v408, %v1257
        %1259 = vdwg.mxu0
        %vm1260 = vcmask 261120
        %v1261 = vsel %vm1260, %v1258, 0.0
        %1262 = vadd.xlane.f32.xlu0 %v1261
        %v1263 = vpop.xlane.xlu0 %1262
        %v1264 = vrcp.pop 32.0
        %v1265 = vmul.f32 32.0, %v1264
        %v1266 = vsub.f32 1.0, %v1265
        %v1267 = vmul.f32 %v1264, %v1266
        %v1268 = vadd.f32 %v1264, %v1267
        %vm1269 = vweird.f32 %v1264
        %v1270 = vsel %vm1269, %v1264, %v1268
        %v1271 = vmul.f32 %v1263, %v1270
        %v1272 = vsub.f32 %v1258, %v1271
        %v1273 = vmul.f32 %v1272, %v1272
        %v1274 = vsel %vm1260, %v1273, 0.0
        %1275 = vadd.xlane.f32.xlu0 %v1274
        %v1276 = vpop.xlane.xlu0 %1275
        %v1277 = vmul.f32 %v1276, 0.032258064
        %v1278 = vadd.f32 %v1277, 1e-08
        %v1279 = vrsqrt.pop %v1278
        %v1280 = vmul.f32 %v1279, %v1278
        %v1281 = vmul.f32 %v1280, %v1279
        %v1282 = vmul.f32 0.5, %v1281
        %v1283 = vsub.f32 1.5, %v1282
        %v1284 = vmul.f32 %v1279, %v1283
        %vm1285 = vweird.f32 %v1278
        %vm1286 = vweird.f32 %v1279
        %vm1287 = vmor %vm1285, %vm1286
        %v1288 = vsel %vm1287, %v1279, %v1284
        %v1289 = vmul.f32 %v1272, %v1288
        %s1290 = sld [smem:[#allocation3]]
        %v1291 = vstv %s1290
        %v1292 = vmul.f32 %v1291, %v1289
        %s1293 = sld [smem:[#allocation4]]
        %v1294 = vstv %s1293
        %v1295 = vadd.f32 %v1292, %v1294
        %1296 = vst.msk [vmem:[%s405] sm:$0xff] %vm1260, %v1295
        %p1297 = scmp.lt.s32.totalorder %s27, 1
        %s1298 = scalar_select %p1297, %s27, 1
        %p1299 = scmp.lt.s32.totalorder %s28, 0
        %s1300 = scalar_select %p1299, %s28, 0
        %s1301 = sadd.s32 %s1300, %s1298
        %s1302 = smul.addr %s1301, 8
        %s1303 = scalar_lea.vmem %s8, %s1302
        // Predicated region
        $region61: #{encoder_forward.6} parent=51 // pred_check
          %p1304 = pneg %p242
        $region62: #{encoder_forward.6} parent=51 // pred_check_branch
          %1306 = sbr.rel (%p1304) target = $region64
        $region63: #{encoder_forward.6} parent=51 // pred_region
          _
        $region64: #{encoder_forward.6} parent=51 // pred_fallthru
          _
      $region52: #{encoder_forward.6} parent=5 // pred_fallthru
        _
      %p1307 = scmp.le.s32.totalorder 2, %s18
      // Predicated region
      $region65: #{encoder_forward.6} parent=5 // pred_check
        %p1308 = pneg %p1307
      $region66: #{encoder_forward.6} parent=5 // pred_check_branch
        %1310 = sbr.rel (%p1308) target = $region68
      $region67: #{encoder_forward.6} parent=5 // pred_region
        %s1311 = ssub.s32 %s18, 2
        // Predicated region
        $region69: #{encoder_forward.6} parent=67 // pred_check
          %p1312 = pneg %p248
        $region70: #{encoder_forward.6} parent=67 // pred_check_branch
          %1314 = sbr.rel (%p1312) target = $region72
        $region71: #{encoder_forward.6} parent=67 // pred_region
          %p1315 = scmp.lt.s32.totalorder %s29, 1
          %s1316 = scalar_select %p1315, %s29, 1
          %p1317 = scmp.lt.s32.totalorder %s30, 0
          %s1318 = scalar_select %p1317, %s30, 0
          %s1319 = sadd.s32 %s1318, %s1316
          %s1320 = smul.addr %s1319, 8
          %s1321 = scalar_lea.vmem %s8, %s1320
        $region72: #{encoder_forward.6} parent=67 // pred_fallthru
          _
      $region68: #{encoder_forward.6} parent=5 // pred_fallthru
        _
    $region6: #{encoder_forward.6} parent=1 // loop_footer
      %s22 = sadd.s32 1, %s18
    $region7: #{encoder_forward.6} parent=1 // loop_footer_branch
      %17 = sbr.rel target = $region3
    $region8: #{encoder_forward.6} parent=1 // loop_exit
      _
    %1322 = vsyncpa [#allocation6], 1
    %s1323 = scalar_lea.sflag [#allocation6], 1
    %1324 = vsyncpa %s1323, 1
    %1325 = vsyncpa [#allocation8], 1

</llo_original>
